<compile_context>
chip_gen: v6e
topology: v6e:2x2x1
jax: 0.10.0
libtpu: 0.0.40
codegen_flags: <defaults>
</compile_context>

<pallas_src>
import functools
import math

import jax
import jax.numpy as jnp
from jax.experimental import pallas as pl
from jax.experimental.pallas import tpu as pltpu


def _round_up(x, m):
    return -(-x // m) * m


def _lora_conv_kernel(x_ref, wd_ref, wu_ref, o_ref, *, kh, kw, wp, th, rank,
                      band_len):
    """One grid step = `th` (stride-1) output rows x full padded width of one image.

    x_ref : (P, C)              flat, spatially padded NHWC image (batch squeezed)
    wd_ref: (C, kh*kw*rank)     tap-stacked down-projection weight
    wu_ref: (rank, c_out_p)     up-projection weight, LoRA scale folded in
    o_ref : (th*wp, c_out_p)    output tile (right-edge halo columns included)
    """
    t = pl.program_id(1)
    rows = th * wp                                   # output pixels per tile
    band_start = pl.multiple_of(t * rows, 8)

    # One MXU call for all kh*kw taps: N = kh*kw*rank lanes instead of rank.
    band = x_ref[pl.ds(band_start, band_len), :]                 # (band_len, C)
    taps = jnp.dot(band, wd_ref[...],
                   preferred_element_type=jnp.float32)           # (band_len, kh*kw*rank)

    # Combine taps with cheap static shifted adds (VPU/XLU, not MXU).
    acc = jnp.zeros((rows, rank), jnp.float32)
    for i in range(kh):
        for j in range(kw):
            off = i * wp + j
            tap = i * kw + j
            acc = acc + taps[off:off + rows, tap * rank:(tap + 1) * rank]

    y = jnp.dot(acc.astype(wu_ref.dtype), wu_ref[...],
                preferred_element_type=jnp.float32)              # (rows, c_out_p)
    o_ref[...] = y.astype(o_ref.dtype)


def lora_conv2d_forward(hidden_states, w_down, w_up, network_alpha=None,
                        stride=(1, 1), padding=(0, 0),
                        compute_dtype=jnp.bfloat16, target_rows=1024):
    """Forward of LoRAConv2dLayer.

    hidden_states: (N, C_in, H, W), any float dtype (preserved on output)
    w_down:        (rank, C_in, kh, kw)   down conv weight, no bias
    w_up:          (C_out, rank, 1, 1)    up 1x1 conv weight, no bias
    compute_dtype: dtype of the streamed operands.  bf16 by default (halves the
                   dominant HBM read stream; accumulation is always f32 but the
                   activations and the f32 accumulator are rounded to bf16, so
                   expect ~bf16-level error).  Use jnp.float32 to match the
                   PyTorch f32-weight forward tightly.
    """
    if isinstance(stride, int):
        stride = (stride, stride)
    rank, c_in, kh, kw = w_down.shape
    if isinstance(padding, str):
        p = padding.lower()
        if p == "valid":
            padding = (0, 0)
        elif p == "same" and stride == (1, 1) and kh % 2 == 1 and kw % 2 == 1:
            padding = ((kh - 1) // 2, (kw - 1) // 2)
        else:
            # TODO(synk): asymmetric 'same' padding (even kernels / stride>1).
            raise NotImplementedError(f"padding={padding!r} not supported")
    if isinstance(padding, int):
        padding = (padding, padding)

    orig_dtype = hidden_states.dtype
    c_out = w_up.shape[0]
    sh, sw = stride
    ph, pw = padding
    n, _, h, w = hidden_states.shape

    hp, wp = h + 2 * ph, w + 2 * pw
    ho1, wo1 = hp - kh + 1, wp - kw + 1            # stride-1 output extent
    kr = kh * kw * rank

    # Lane-dense c_out padding only when it pays for itself.
    if c_out % 128 == 0 or c_out <= 32:
        c_out_p = c_out
    else:
        c_out_p = _round_up(c_out, 128)

    # Row-tile selection: th stride-1 output rows per grid step, th*wp % 8 == 0
    # (sublane-aligned dynamic slice starts and output block rows).
    m = 8 // math.gcd(wp, 8)
    th = max(m, (max(target_rows, wp) // wp) // m * m)
    th = min(th, _round_up(ho1, m))

    itm_c = jnp.dtype(compute_dtype).itemsize
    itm_o = jnp.dtype(orig_dtype).itemsize

    def plan(th_):
        n_tiles_ = -(-ho1 // th_)
        band_len_ = _round_up((th_ + kh - 1) * wp + (kw - 1), 8)
        p_flat_ = (n_tiles_ - 1) * th_ * wp + band_len_
        rows_ = th_ * wp
        est_ = (2 * p_flat_ * c_in * itm_c            # double-buffered resident image
                + 2 * rows_ * c_out_p * itm_o         # double-buffered output tile
                + 2 * (c_in * kr + rank * c_out_p) * itm_c
                + band_len_ * c_in * itm_c            # band value copy
                + band_len_ * kr * 4                  # tap matmul result (f32)
                + rows_ * rank * (4 + itm_c)          # accumulator (+ cast)
                + rows_ * c_out_p * 4                 # up matmul result (f32)
                + (8 << 20))                          # compiler scratch headroom
        return n_tiles_, band_len_, p_flat_, est_

    budget = 48 << 20                                 # v7x-safe (64 MiB/TC physical)
    n_tiles, band_len, p_flat, est = plan(th)
    while est > budget and th > m:
        th = max(m, th - m)
        n_tiles, band_len, p_flat, est = plan(th)
    vmem_limit = int(min(max(est, 32 << 20), budget))

    # NCHW -> flat padded (N, P, C_in) in one fused XLA pass.
    x = hidden_states.astype(compute_dtype).transpose(0, 2, 3, 1)
    x = jnp.pad(x, ((0, 0), (ph, ph), (pw, pw), (0, 0)))
    x = x.reshape(n, hp * wp, c_in)
    x = jnp.pad(x, ((0, 0), (0, p_flat - hp * wp), (0, 0)))

    # Tap-stacked, lane-dense down weight: wd[c, (i*kw+j)*rank + r] = w_down[r,c,i,j].
    wd = w_down.transpose(1, 2, 3, 0).reshape(c_in, kr).astype(compute_dtype)

    # Up weight with the LoRA scale folded in.
    scale = 1.0 if network_alpha is None else float(network_alpha) / rank
    wu = w_up.reshape(c_out, rank).T * scale
    wu = jnp.pad(wu, ((0, 0), (0, c_out_p - c_out))).astype(compute_dtype)

    kernel = functools.partial(_lora_conv_kernel, kh=kh, kw=kw, wp=wp, th=th,
                               rank=rank, band_len=band_len)

    out = pl.pallas_call(
        kernel,
        out_shape=jax.ShapeDtypeStruct((n, n_tiles * th * wp, c_out_p), orig_dtype),
        grid=(n, n_tiles),
        in_specs=[
            # whole padded flat image, re-fetched only when the batch index changes
            pl.BlockSpec((None, p_flat, c_in), lambda b, t: (b, 0, 0)),
            pl.BlockSpec((c_in, kr), lambda b, t: (0, 0)),
            pl.BlockSpec((rank, c_out_p), lambda b, t: (0, 0)),
        ],
        out_specs=pl.BlockSpec((None, th * wp, c_out_p), lambda b, t: (b, t, 0)),
        compiler_params=pltpu.CompilerParams(
            dimension_semantics=("parallel", "parallel"),
            vmem_limit_bytes=vmem_limit),
    )(x, wd, wu)

    # Drop tail-tile rows, right-edge halo columns and channel padding; to NCHW.
    out = out[:, :ho1 * wp, :c_out].reshape(n, ho1, wp, c_out)[:, :, :wo1, :]
    out = out.transpose(0, 3, 1, 2)
    if sh > 1 or sw > 1:
        # TODO(synk): stride>1 computes the stride-1 result and subsamples
        # (sh*sw x extra compute); a phase-decomposed fast path would avoid it.
        out = out[:, :, ::sh, ::sw]
    return out


def lora_conv2d_reference(x, w_down, w_up, network_alpha=None,
                          stride=(1, 1), padding=(0, 0)):
    """Pure-JAX (f32) reference matching the PyTorch forward."""
    orig_dtype = x.dtype
    xf = x.astype(w_down.dtype)
    down = jax.lax.conv_general_dilated(
        xf, w_down, window_strides=stride,
        padding=[(padding[0], padding[0]), (padding[1], padding[1])],
        dimension_numbers=("NCHW", "OIHW", "NCHW"))
    up = jax.lax.conv_general_dilated(
        down, w_up, window_strides=(1, 1), padding=[(0, 0), (0, 0)],
        dimension_numbers=("NCHW", "OIHW", "NCHW"))
    if network_alpha is not None:
        up = up * (network_alpha / w_down.shape[0])
    return up.astype(orig_dtype)


if __name__ == "__main__":
    in_features, out_features, rank = 4, 8, 4
    kernel_size, stride, padding = (3, 3), (1, 1), (1, 1)
    network_alpha = 8.0

    key = jax.random.PRNGKey(0)
    kx, kd, ku = jax.random.split(key, 3)

    x = jax.random.normal(kx, (2, in_features, 16, 16), dtype=jnp.float32)

    # Deterministic parameter init per the module's __init__:
    #   down.weight ~ N(0, (1/rank)^2), up.weight = 0
    w_down = (1.0 / rank) * jax.random.normal(
        kd, (rank, in_features, kernel_size[0], kernel_size[1]),
        dtype=jnp.float32)
    w_up = jnp.zeros((out_features, rank, 1, 1), dtype=jnp.float32)

    # 1) Module init (up == 0): output must be exactly zero.
    out = lora_conv2d_forward(x, w_down, w_up, network_alpha,
                              stride=stride, padding=padding)
    out = jax.block_until_ready(out)
    ref = lora_conv2d_reference(x, w_down, w_up, network_alpha,
                                stride=stride, padding=padding)
    assert out.shape == (2, out_features, 16, 16) and out.dtype == x.dtype
    assert jnp.allclose(out, ref, atol=1e-6)

    # 2) Non-zero up weight: f32 compute path matches the f32 reference tightly,
    #    bf16 streaming path to bf16 tolerance.
    w_up_nz = 0.1 * jax.random.normal(ku, w_up.shape, dtype=jnp.float32)
    ref2 = lora_conv2d_reference(x, w_down, w_up_nz, network_alpha,
                                 stride=stride, padding=padding)

    out_f32 = jax.block_until_ready(
        lora_conv2d_forward(x, w_down, w_up_nz, network_alpha,
                            stride=stride, padding=padding,
                            compute_dtype=jnp.float32))
    assert jnp.allclose(out_f32, ref2, atol=1e-4, rtol=1e-4)

    out_bf16 = jax.block_until_ready(
        lora_conv2d_forward(x, w_down, w_up_nz, network_alpha,
                            stride=stride, padding=padding,
                            compute_dtype=jnp.bfloat16))
    assert jnp.allclose(out_bf16, ref2, atol=5e-2, rtol=5e-2)

    # 3) Module default config: 1x1 kernel, stride 1, no padding.
    w_down_1x1 = (1.0 / rank) * jax.random.normal(
        kd, (rank, in_features, 1, 1), dtype=jnp.float32)
    ref3 = lora_conv2d_reference(x, w_down_1x1, w_up_nz, network_alpha,
                                 stride=(1, 1), padding=(0, 0))
    out3 = jax.block_until_ready(
        lora_conv2d_forward(x, w_down_1x1, w_up_nz, network_alpha,
                            stride=(1, 1), padding=(0, 0),
                            compute_dtype=jnp.float32))
    assert out3.shape == (2, out_features, 16, 16)
    assert jnp.allclose(out3, ref3, atol=1e-4, rtol=1e-4)

    # 4) Stride-2 path (wrapper-level subsample of the stride-1 output).
    ref4 = lora_conv2d_reference(x, w_down, w_up_nz, network_alpha,
                                 stride=(2, 2), padding=(1, 1))
    out4 = jax.block_until_ready(
        lora_conv2d_forward(x, w_down, w_up_nz, network_alpha,
                            stride=(2, 2), padding=(1, 1),
                            compute_dtype=jnp.float32))
    assert out4.shape == (2, out_features, 8, 8)
    assert jnp.allclose(out4, ref4, atol=1e-4, rtol=1e-4)

    print("KERNEL_OK")
</pallas_src>

<mosaic_0001>
module attributes {stable_mosaic.version = 11 : i64} {
  func.func @_lora_conv_kernel(%arg0: i32, %arg1: i32, %arg2: memref<1x328x4xbf16, #tpu.memory_space<vmem>>, %arg3: memref<4x36xbf16, #tpu.memory_space<vmem>>, %arg4: memref<4x8xbf16, #tpu.memory_space<vmem>>, %arg5: memref<1x288x8xf32, #tpu.memory_space<vmem>>) attributes {dimension_semantics = [#tpu.dimension_semantics<parallel>, #tpu.dimension_semantics<parallel>], iteration_bounds = array<i64: 2, 1>, scalar_prefetch = 0 : i64, scratch_operands = 0 : i64, tpu.core_type = #tpu.core_type<tc>, window_params = [{transform_indices = @transform_0, window_bounds = array<i64: 1, 328, 4>}, {pipeline_mode = #tpu.pipeline_mode<synchronous>, transform_indices = @transform_1, window_bounds = array<i64: 4, 36>}, {pipeline_mode = #tpu.pipeline_mode<synchronous>, transform_indices = @transform_2, window_bounds = array<i64: 4, 8>}, {transform_indices = @transform_3, window_bounds = array<i64: 1, 288, 8>}]} {
    %c288_i32 = arith.constant 288 : i32
    %0 = arith.muli %arg1, %c288_i32 : i32
    %1 = tpu.assume_multiple %0, 8 : i32
    %c0 = arith.constant 0 : index
    %2 = arith.index_cast %1 : i32 to index
    %c0_0 = arith.constant 0 : index
    %3 = vector.load %arg2[%c0, %2, %c0_0] : memref<1x328x4xbf16, #tpu.memory_space<vmem>>, vector<1x328x4xbf16>
    %4 = vector.shape_cast %3 : vector<1x328x4xbf16> to vector<328x4xbf16>
    %c0_1 = arith.constant 0 : index
    %c0_2 = arith.constant 0 : index
    %5 = vector.load %arg3[%c0_1, %c0_2] : memref<4x36xbf16, #tpu.memory_space<vmem>>, vector<4x36xbf16>
    %cst = arith.constant dense<0.000000e+00> : vector<328x36xf32>
    %6 = tpu.matmul %4, %5, %cst {dimension_numbers = #tpu.dot_dimension_numbers<[1], [0], [0], [1], [0, 0, 1, 1], [], []>} : vector<328x4xbf16>, vector<4x36xbf16>, vector<328x36xf32> -> vector<328x36xf32>
    %cst_3 = arith.constant 0.000000e+00 : f32
    %7 = vector.broadcast %cst_3 : f32 to vector<288x4xf32>
    %8 = vector.extract_strided_slice %6 {offsets = [0, 0], sizes = [288, 4], strides = [1, 1]} : vector<328x36xf32> to vector<288x4xf32>
    %9 = arith.addf %7, %8 : vector<288x4xf32>
    %10 = vector.extract_strided_slice %6 {offsets = [1, 4], sizes = [288, 4], strides = [1, 1]} : vector<328x36xf32> to vector<288x4xf32>
    %11 = arith.addf %9, %10 : vector<288x4xf32>
    %12 = vector.extract_strided_slice %6 {offsets = [2, 8], sizes = [288, 4], strides = [1, 1]} : vector<328x36xf32> to vector<288x4xf32>
    %13 = arith.addf %11, %12 : vector<288x4xf32>
    %14 = vector.extract_strided_slice %6 {offsets = [18, 12], sizes = [288, 4], strides = [1, 1]} : vector<328x36xf32> to vector<288x4xf32>
    %15 = arith.addf %13, %14 : vector<288x4xf32>
    %16 = vector.extract_strided_slice %6 {offsets = [19, 16], sizes = [288, 4], strides = [1, 1]} : vector<328x36xf32> to vector<288x4xf32>
    %17 = arith.addf %15, %16 : vector<288x4xf32>
    %18 = vector.extract_strided_slice %6 {offsets = [20, 20], sizes = [288, 4], strides = [1, 1]} : vector<328x36xf32> to vector<288x4xf32>
    %19 = arith.addf %17, %18 : vector<288x4xf32>
    %20 = vector.extract_strided_slice %6 {offsets = [36, 24], sizes = [288, 4], strides = [1, 1]} : vector<328x36xf32> to vector<288x4xf32>
    %21 = arith.addf %19, %20 : vector<288x4xf32>
    %22 = vector.extract_strided_slice %6 {offsets = [37, 28], sizes = [288, 4], strides = [1, 1]} : vector<328x36xf32> to vector<288x4xf32>
    %23 = arith.addf %21, %22 : vector<288x4xf32>
    %24 = vector.extract_strided_slice %6 {offsets = [38, 32], sizes = [288, 4], strides = [1, 1]} : vector<328x36xf32> to vector<288x4xf32>
    %25 = arith.addf %23, %24 : vector<288x4xf32>
    %26 = arith.truncf %25 : vector<288x4xf32> to vector<288x4xbf16>
    %c0_4 = arith.constant 0 : index
    %c0_5 = arith.constant 0 : index
    %27 = vector.load %arg4[%c0_4, %c0_5] : memref<4x8xbf16, #tpu.memory_space<vmem>>, vector<4x8xbf16>
    %cst_6 = arith.constant dense<0.000000e+00> : vector<288x8xf32>
    %28 = tpu.matmul %26, %27, %cst_6 {dimension_numbers = #tpu.dot_dimension_numbers<[1], [0], [0], [1], [0, 0, 1, 1], [], []>} : vector<288x4xbf16>, vector<4x8xbf16>, vector<288x8xf32> -> vector<288x8xf32>
    %c0_7 = arith.constant 0 : index
    %c0_8 = arith.constant 0 : index
    %c0_9 = arith.constant 0 : index
    %29 = vector.load %arg5[%c0_7, %c0_8, %c0_9] : memref<1x288x8xf32, #tpu.memory_space<vmem>>, vector<1x288x8xf32>
    %30 = vector.shape_cast %29 : vector<1x288x8xf32> to vector<288x8xf32>
    %31 = vector.shape_cast %28 : vector<288x8xf32> to vector<1x288x8xf32>
    tpu.vector_store %arg5[%c0_7, %c0_8, %c0_9], %31 {strides = array<i32>} : memref<1x288x8xf32, #tpu.memory_space<vmem>>, vector<1x288x8xf32>,
    return
  }
  func.func @transform_0(%arg0: i32, %arg1: i32) -> (i32, i32, i32) {
    %c0_i32 = arith.constant 0 : i32
    %c0_i32_0 = arith.constant 0 : i32
    %c0_i32_1 = arith.constant 0 : i32
    return %arg0, %c0_i32, %c0_i32_0 : i32, i32, i32
  }
  func.func @transform_1(%arg0: i32, %arg1: i32) -> (i32, i32) {
    %c0_i32 = arith.constant 0 : i32
    %c0_i32_0 = arith.constant 0 : i32
    %c0_i32_1 = arith.constant 0 : i32
    return %c0_i32, %c0_i32_0 : i32, i32
  }
  func.func @transform_2(%arg0: i32, %arg1: i32) -> (i32, i32) {
    %c0_i32 = arith.constant 0 : i32
    %c0_i32_0 = arith.constant 0 : i32
    %c0_i32_1 = arith.constant 0 : i32
    return %c0_i32, %c0_i32_0 : i32, i32
  }
  func.func @transform_3(%arg0: i32, %arg1: i32) -> (i32, i32, i32) {
    %c0_i32 = arith.constant 0 : i32
    %c0_i32_0 = arith.constant 0 : i32
    return %arg0, %arg1, %c0_i32 : i32, i32, i32
  }
}

</mosaic_0001>

<llo_original>
// kernel: tpu_custom_call.1
$region0: #{tpu_custom_call.1}
  #allocation0 [shape = 'u32[]', space=smem, size = 0x4, offset = 0x4, fixed_abs, tag = 'smem constant byte address 0x4 - core index']
  #allocation1 [shape = 'u32[144,128]{1,0:T(1,128)}', space=vmem, size = 0x12000, scoped, tag = 'internal scratch']
  %s0 = inlined_call_operand.vmem [shape: bf16[2,328,4], index: 0, kind: input, shape index: {}]
  %s1 = inlined_call_operand.vmem [shape: bf16[4,36], index: 1, kind: input, shape index: {}]
  %s2 = inlined_call_operand.vmem [shape: bf16[4,8], index: 2, kind: input, shape index: {}]
  %s3 = inlined_call_operand.vmem [shape: f32[2,288,8], index: 3, kind: output, shape index: {}]
  %s4 = sld [smem:[#allocation0]]
  $region45: #{tpu_custom_call.1} parent=0
    _
  %s6 = ssub.s32 1, %s4
  %s7 = scalar_select 0, %s6, %s4
  loop: start=0, step=1, limit=4
  $region2: #{tpu_custom_call.1} parent=0 // loop_pre_header
    _
  $region3: #{tpu_custom_call.1} parent=0 // loop_header
    %s9 = sphi 0, %s13
    %p10 = scmp.ge.s32.totalorder %s9, 4
    %s16 = sphi 0, %s28
    %s17 = sphi 0, %s24
    %s18 = sphi 0, %s16
    %s19 = sphi 0, %s17
    %s20 = sphi 0, %s18
    %s21 = sphi 0, %s19
    %s31 = sphi 0, %s33
    %s34 = sphi 0, %s31
    %s35 = sphi 0, %s34
    %s51 = sphi 0, %s35
    %s55 = sphi 0, %s55
    %s57 = sphi 0, %s55
    %s58 = sphi 0, %s57
    %s72 = sphi 0, %s58
    %s76 = sphi 0, %s76
    %s78 = sphi 0, %s76
    %s79 = sphi 0, %s78
    %s93 = sphi 0, %s79
    %s101 = sphi 0, %s103
    %s104 = sphi 0, %s101
    %s105 = sphi 0, %s104
    %s121 = sphi 0, %s105
  $region4: #{tpu_custom_call.1} parent=0 // loop_header_branch
    %12 = sbr.rel (%p10) target = $region8
  $region5: #{tpu_custom_call.1} parent=0 // loop_body
    %s14 = ssub.s32 %s9, 1
    %s15 = ssub.s32 %s9, 2
    %s22 = sadd.s32 1, %s17
    %p23 = scmp.ge.s32.totalorder %s22, 1
    %s24 = scalar_select %p23, 0, %s22
    %s25 = sadd.s32 1, %s16
    %s26 = scalar_select %p23, %s25, %s16
    %p27 = scmp.ge.s32.totalorder %s26, 2
    %s28 = scalar_select %p27, 0, %s26
    %s29 = ssub.s32 %s16, %s28
    %p30 = scmp.eq.s32.totalorder %s29, 0
    %s32 = sadd.s32 %s31, 1
    %s33 = scalar_select %p30, %s31, %s32
    %p36 = pneg %p30
    %p37 = scmp.eq.s32.totalorder %s9, 1
    %p38 = por %p36, %p37
    %p39 = scmp.ne.s32.totalorder %s31, %s34
    %p40 = scmp.eq.s32.totalorder %s9, 0
    %p41 = por %p39, %p40
    %p42 = scmp.ne.s32.totalorder %s31, %s34
    %p43 = scmp.eq.s32.totalorder %s14, 1
    %p44 = por %p42, %p43
    %p45 = scmp.ne.s32.totalorder %s34, %s35
    %p46 = scmp.eq.s32.totalorder %s14, 0
    %p47 = por %p45, %p46
    %p48 = scmp.ne.s32.totalorder %s34, %s35
    %p49 = scmp.eq.s32.totalorder %s15, 1
    %p50 = por %p48, %p49
    %p52 = scmp.ne.s32.totalorder %s35, %s51
    %p53 = scmp.eq.s32.totalorder %s15, 0
    %p54 = por %p52, %p53
    %s56 = sadd.s32 %s55, 1
    %p59 = scmp.eq.s32.totalorder %s9, 1
    %p60 = scmp.ne.s32.totalorder %s55, %s57
    %p61 = scmp.eq.s32.totalorder %s9, 0
    %p62 = por %p60, %p61
    %p63 = scmp.ne.s32.totalorder %s55, %s57
    %p64 = scmp.eq.s32.totalorder %s14, 1
    %p65 = por %p63, %p64
    %p66 = scmp.ne.s32.totalorder %s57, %s58
    %p67 = scmp.eq.s32.totalorder %s14, 0
    %p68 = por %p66, %p67
    %p69 = scmp.ne.s32.totalorder %s57, %s58
    %p70 = scmp.eq.s32.totalorder %s15, 1
    %p71 = por %p69, %p70
    %p73 = scmp.ne.s32.totalorder %s58, %s72
    %p74 = scmp.eq.s32.totalorder %s15, 0
    %p75 = por %p73, %p74
    %s77 = sadd.s32 %s76, 1
    %p80 = scmp.eq.s32.totalorder %s9, 1
    %p81 = scmp.ne.s32.totalorder %s76, %s78
    %p82 = scmp.eq.s32.totalorder %s9, 0
    %p83 = por %p81, %p82
    %p84 = scmp.ne.s32.totalorder %s76, %s78
    %p85 = scmp.eq.s32.totalorder %s14, 1
    %p86 = por %p84, %p85
    %p87 = scmp.ne.s32.totalorder %s78, %s79
    %p88 = scmp.eq.s32.totalorder %s14, 0
    %p89 = por %p87, %p88
    %p90 = scmp.ne.s32.totalorder %s78, %s79
    %p91 = scmp.eq.s32.totalorder %s15, 1
    %p92 = por %p90, %p91
    %p94 = scmp.ne.s32.totalorder %s79, %s93
    %p95 = scmp.eq.s32.totalorder %s15, 0
    %p96 = por %p94, %p95
    %s97 = ssub.s32 %s16, %s28
    %s98 = ssub.s32 %s17, %s24
    %s99 = sor.u32 %s97, %s98
    %p100 = scmp.eq.s32.totalorder %s99, 0
    %s102 = sadd.s32 %s101, 1
    %s103 = scalar_select %p100, %s101, %s102
    %p106 = pneg %p100
    %p107 = scmp.eq.s32.totalorder %s9, 1
    %p108 = por %p106, %p107
    %p109 = scmp.ne.s32.totalorder %s101, %s104
    %p110 = scmp.eq.s32.totalorder %s9, 0
    %p111 = por %p109, %p110
    %p112 = scmp.ne.s32.totalorder %s101, %s104
    %p113 = scmp.eq.s32.totalorder %s14, 1
    %p114 = por %p112, %p113
    %p115 = scmp.ne.s32.totalorder %s104, %s105
    %p116 = scmp.eq.s32.totalorder %s14, 0
    %p117 = por %p115, %p116
    %p118 = scmp.ne.s32.totalorder %s104, %s105
    %p119 = scmp.eq.s32.totalorder %s15, 1
    %p120 = por %p118, %p119
    %p122 = scmp.ne.s32.totalorder %s105, %s121
    %p123 = scmp.eq.s32.totalorder %s15, 0
    %p124 = por %p122, %p123
    %p125 = scmp.le.s32.totalorder 1, %s9
    %p126 = scmp.lt.s32.totalorder %s9, 3
    %p127 = pnand %p125, %p126
    %p128 = pneg %p127
    // Predicated region
    $region9: #{tpu_custom_call.1} parent=5 // pred_check
      _
    $region10: #{tpu_custom_call.1} parent=5 // pred_check_branch
      %130 = sbr.rel (%p127) target = $region12
    $region11: #{tpu_custom_call.1} parent=5 // pred_region
      %s131 = ssub.s32 %s9, 1
      // Predicated region
      $region13: #{tpu_custom_call.1} parent=11 // pred_check
        %p132 = pneg %p68
      $region14: #{tpu_custom_call.1} parent=11 // pred_check_branch
        %134 = sbr.rel (%p132) target = $region16
      $region15: #{tpu_custom_call.1} parent=11 // pred_region
        _
      $region16: #{tpu_custom_call.1} parent=11 // pred_fallthru
        _
      // Predicated region
      $region17: #{tpu_custom_call.1} parent=11 // pred_check
        %p135 = pneg %p89
      $region18: #{tpu_custom_call.1} parent=11 // pred_check_branch
        %137 = sbr.rel (%p135) target = $region20
      $region19: #{tpu_custom_call.1} parent=11 // pred_region
        _
      $region20: #{tpu_custom_call.1} parent=11 // pred_fallthru
        _
    $region12: #{tpu_custom_call.1} parent=5 // pred_fallthru
      _
    %p138 = scmp.lt.s32.totalorder %s9, 2
    // Predicated region
    $region21: #{tpu_custom_call.1} parent=5 // pred_check
      %p139 = pneg %p138
    $region22: #{tpu_custom_call.1} parent=5 // pred_check_branch
      %141 = sbr.rel (%p139) target = $region24
    $region23: #{tpu_custom_call.1} parent=5 // pred_region
      // Predicated region
      $region25: #{tpu_custom_call.1} parent=23 // pred_check
        %p142 = pneg %p41
      $region26: #{tpu_custom_call.1} parent=23 // pred_check_branch
        %144 = sbr.rel (%p142) target = $region28
      $region27: #{tpu_custom_call.1} parent=23 // pred_region
        %p145 = scmp.lt.s32.totalorder %s16, 1
        %s146 = scalar_select %p145, %s16, 1
        %s147 = smul.addr %s146, 41
        %s148 = smul.addr %s147, 4
        %s149 = scalar_lea.vmem %s0, %s148
      $region28: #{tpu_custom_call.1} parent=23 // pred_fallthru
        _
    $region24: #{tpu_custom_call.1} parent=5 // pred_fallthru
      _
    %p150 = scmp.le.s32.totalorder 1, %s9
    %p151 = scmp.lt.s32.totalorder %s9, 3
    %p152 = pnand %p150, %p151
    %p153 = pneg %p152
    // Predicated region
    $region29: #{tpu_custom_call.1} parent=5 // pred_check
      _
    $region30: #{tpu_custom_call.1} parent=5 // pred_check_branch
      %155 = sbr.rel (%p152) target = $region32
    $region31: #{tpu_custom_call.1} parent=5 // pred_region
      %s156 = ssub.s32 %s9, 1
      %p157 = scmp.lt.s32.totalorder %s18, 1
      %s158 = scalar_select %p157, %s18, 1
      %s159 = smul.addr %s158, 41
      %s160 = smul.addr %s159, 4
      %s161 = scalar_lea.vmem %s0, %s160
      %p162 = pneg %p47
      %p163 = pneg %p44
      %p164 = pneg %p68
      %p165 = pneg %p65
      %p166 = pneg %p89
      %p167 = pneg %p86
      %p168 = pneg %p117
      %p169 = pneg %p114
      %s170 = smul.u32 36, %s19
      %p171 = scmp.lt.s32.totalorder %s18, 1
      %s172 = scalar_select %p171, %s18, 1
      %p173 = scmp.lt.s32.totalorder %s170, 35
      %s174 = scalar_select %p173, %s170, 35
      %s175 = smul.addr %s172, 36
      %s176 = sadd.s32 %s174, %s175
      %s177 = smul.addr %s176, 8
      %s178 = scalar_lea.vmem %s3, %s177
      %p179 = scmp.lt.s32.totalorder %s18, 1
      %s180 = scalar_select %p179, %s18, 1
      %s181 = smul.addr %s180, 41
      %s182 = smul.addr %s181, 4
      %s183 = scalar_lea.vmem %s0, %s182
      %s184 = smul.u32 36, %s19
      %p185 = scmp.lt.s32.totalorder %s18, 1
      %s186 = scalar_select %p185, %s18, 1
      %p187 = scmp.lt.s32.totalorder %s184, 35
      %s188 = scalar_select %p187, %s184, 35
      %s189 = smul.addr %s186, 36
      %s190 = sadd.s32 %s188, %s189
      %s191 = smul.addr %s190, 8
      %s192 = scalar_lea.vmem %s3, %s191
      %s193 = smul.u32 36, %s19
      %s195 = smul.u32 %s19, 288
      %s196 = sshra.s32 %s195, 3
      %s197 = sand.u32 %s195, 7
      %s198 = smul.addr %s196, 4
      %s199 = scalar_lea.vmem %s183, %s198
      %v200 = vld [vmem:[%s199] sm:$0xf]
      %v201 = vld [vmem:[%s199 + $0x4] sm:$0xf]
      %v202 = vld [vmem:[%s199 + $0x8] sm:$0xf]
      %v203 = vld [vmem:[%s199 + $0xc] sm:$0xf]
      %v204 = vld [vmem:[%s199 + $0x10] sm:$0xf]
      %v205 = vld [vmem:[%s199 + $0x14] sm:$0xf]
      %v206 = vld [vmem:[%s199 + $0x18] sm:$0xf]
      %v207 = vld [vmem:[%s199 + $0x1c] sm:$0xf]
      %v208 = vld [vmem:[%s199 + $0x20] sm:$0xf]
      %v209 = vld [vmem:[%s199 + $0x24] sm:$0xf]
      %v210 = vld [vmem:[%s199 + $0x28] sm:$0xf]
      %v211 = vld [vmem:[%s199 + $0x2c] sm:$0xf]
      %v212 = vld [vmem:[%s199 + $0x30] sm:$0xf]
      %v213 = vld [vmem:[%s199 + $0x34] sm:$0xf]
      %v214 = vld [vmem:[%s199 + $0x38] sm:$0xf]
      %v215 = vld [vmem:[%s199 + $0x3c] sm:$0xf]
      %v216 = vld [vmem:[%s199 + $0x40] sm:$0xf]
      %v217 = vld [vmem:[%s199 + $0x44] sm:$0xf]
      %v218 = vld [vmem:[%s199 + $0x48] sm:$0xf]
      %v219 = vld [vmem:[%s199 + $0x4c] sm:$0xf]
      %v220 = vld [vmem:[%s199 + $0x50] sm:$0xf]
      %v221 = vld [vmem:[%s199 + $0x54] sm:$0xf]
      %v222 = vld [vmem:[%s199 + $0x58] sm:$0xf]
      %v223 = vld [vmem:[%s199 + $0x5c] sm:$0xf]
      %v224 = vld [vmem:[%s199 + $0x60] sm:$0xf]
      %v225 = vld [vmem:[%s199 + $0x64] sm:$0xf]
      %v226 = vld [vmem:[%s199 + $0x68] sm:$0xf]
      %v227 = vld [vmem:[%s199 + $0x6c] sm:$0xf]
      %v228 = vld [vmem:[%s199 + $0x70] sm:$0xf]
      %v229 = vld [vmem:[%s199 + $0x74] sm:$0xf]
      %v230 = vld [vmem:[%s199 + $0x78] sm:$0xf]
      %v231 = vld [vmem:[%s199 + $0x7c] sm:$0xf]
      %v232 = vld [vmem:[%s199 + $0x80] sm:$0xf]
      %v233 = vld [vmem:[%s199 + $0x84] sm:$0xf]
      %v234 = vld [vmem:[%s199 + $0x88] sm:$0xf]
      %v235 = vld [vmem:[%s199 + $0x8c] sm:$0xf]
      %v236 = vld [vmem:[%s199 + $0x90] sm:$0xf]
      %v237 = vld [vmem:[%s199 + $0x94] sm:$0xf]
      %v238 = vld [vmem:[%s199 + $0x98] sm:$0xf]
      %v239 = vld [vmem:[%s199 + $0x9c] sm:$0xf]
      %v240 = vld [vmem:[%s199 + $0xa0] sm:$0xf]
      %v241 = vld [vmem:[%s1] sm:$0x3]
      %v283 = vunpack.c.l.b16 %v200
      %v284 = vunpack.c.l.b16 %v201
      %v285 = vunpack.c.l.b16 %v202
      %v286 = vunpack.c.l.b16 %v203
      %v287 = vunpack.c.l.b16 %v204
      %v288 = vunpack.c.l.b16 %v205
      %v289 = vunpack.c.l.b16 %v206
      %v290 = vunpack.c.l.b16 %v207
      %v291 = vunpack.c.l.b16 %v208
      %v292 = vunpack.c.l.b16 %v209
      %v293 = vunpack.c.l.b16 %v210
      %v294 = vunpack.c.l.b16 %v211
      %v295 = vunpack.c.l.b16 %v212
      %v296 = vunpack.c.l.b16 %v213
      %v297 = vunpack.c.l.b16 %v214
      %v298 = vunpack.c.l.b16 %v215
      %v299 = vunpack.c.l.b16 %v216
      %v300 = vunpack.c.l.b16 %v217
      %v301 = vunpack.c.l.b16 %v218
      %v302 = vunpack.c.l.b16 %v219
      %v303 = vunpack.c.l.b16 %v220
      %v304 = vunpack.c.l.b16 %v221
      %v305 = vunpack.c.l.b16 %v222
      %v306 = vunpack.c.l.b16 %v223
      %v307 = vunpack.c.l.b16 %v224
      %v308 = vunpack.c.l.b16 %v225
      %v309 = vunpack.c.l.b16 %v226
      %v310 = vunpack.c.l.b16 %v227
      %v311 = vunpack.c.l.b16 %v228
      %v312 = vunpack.c.l.b16 %v229
      %v313 = vunpack.c.l.b16 %v230
      %v314 = vunpack.c.l.b16 %v231
      %v315 = vunpack.c.l.b16 %v232
      %v316 = vunpack.c.l.b16 %v233
      %v317 = vunpack.c.l.b16 %v234
      %v318 = vunpack.c.l.b16 %v235
      %v319 = vunpack.c.l.b16 %v236
      %v320 = vunpack.c.l.b16 %v237
      %v321 = vunpack.c.l.b16 %v238
      %v322 = vunpack.c.l.b16 %v239
      %v323 = vunpack.c.l.b16 %v240
      %v324 = vpack.c.b16 %v284, %v283
      %v325 = vpack.c.b16 %v286, %v285
      %v326 = vpack.c.b16 %v288, %v287
      %v327 = vpack.c.b16 %v290, %v289
      %v328 = vpack.c.b16 %v292, %v291
      %v329 = vpack.c.b16 %v294, %v293
      %v330 = vpack.c.b16 %v296, %v295
      %v331 = vpack.c.b16 %v298, %v297
      %v332 = vpack.c.b16 %v300, %v299
      %v333 = vpack.c.b16 %v302, %v301
      %v334 = vpack.c.b16 %v304, %v303
      %v335 = vpack.c.b16 %v306, %v305
      %v336 = vpack.c.b16 %v308, %v307
      %v337 = vpack.c.b16 %v310, %v309
      %v338 = vpack.c.b16 %v312, %v311
      %v339 = vpack.c.b16 %v314, %v313
      %v340 = vpack.c.b16 %v316, %v315
      %v341 = vpack.c.b16 %v318, %v317
      %v342 = vpack.c.b16 %v320, %v319
      %v343 = vpack.c.b16 %v322, %v321
      %v344 = vpack.c.b16 %v323, %v323
      %vm345 = vcmask 31744
      %v347 = vsel %vm345, %v324, 0
      %v350 = vsel %vm345, %v325, 0
      %v353 = vsel %vm345, %v326, 0
      %v356 = vsel %vm345, %v327, 0
      %v359 = vsel %vm345, %v328, 0
      %v362 = vsel %vm345, %v329, 0
      %v365 = vsel %vm345, %v330, 0
      %v368 = vsel %vm345, %v331, 0
      %v371 = vsel %vm345, %v332, 0
      %v374 = vsel %vm345, %v333, 0
      %v377 = vsel %vm345, %v334, 0
      %v380 = vsel %vm345, %v335, 0
      %v383 = vsel %vm345, %v336, 0
      %v386 = vsel %vm345, %v337, 0
      %v389 = vsel %vm345, %v338, 0
      %v392 = vsel %vm345, %v339, 0
      %v395 = vsel %vm345, %v340, 0
      %v398 = vsel %vm345, %v341, 0
      %v401 = vsel %vm345, %v342, 0
      %v404 = vsel %vm345, %v343, 0
      %v407 = vsel %vm345, %v344, 0
      %vm409 = vcmask 1041408
      %v411 = vsel %vm409, %v241, 0
      %413 = vmatprep.subr.bf16.mxu0 0
      %414 = vmatpush1.bf16.msra.mxu0 0
      %415 = vmatprep.subr.bf16.mxu0 0
      %416 = vmatpush1.bf16.msra.mxu0 0
      %417 = vmatprep.subr.bf16.mxu0 0
      %418 = vmatpush1.bf16.msra.mxu0 0
      %419 = vmatprep.subr.bf16.mxu0 0
      %420 = vmatpush1.bf16.msra.mxu0 0
      %421 = vmatprep.subr.bf16.mxu0 0
      %422 = vmatpush1.bf16.msra.mxu0 0
      %423 = vmatprep.subr.bf16.mxu0 0
      %424 = vmatpush1.bf16.msra.mxu0 0
      %425 = vmatprep.subr.bf16.mxu0 0
      %426 = vmatpush1.bf16.msra.mxu0 0
      %427 = vmatprep.subr.bf16.mxu0 0
      %428 = vmatpush1.bf16.msra.mxu0 %v411
      %429 = vmatprep.subr.bf16.mxu0 0
      %430 = vmatpush2.bf16.msra.mxu0 0
      %431 = vmatprep.subr.bf16.mxu0 0
      %432 = vmatpush2.bf16.msra.mxu0 0
      %433 = vmatprep.subr.bf16.mxu0 0
      %434 = vmatpush2.bf16.msra.mxu0 0
      %435 = vmatprep.subr.bf16.mxu0 0
      %436 = vmatpush2.bf16.msra.mxu0 0
      %437 = vmatprep.subr.bf16.mxu0 0
      %438 = vmatpush2.bf16.msra.mxu0 0
      %439 = vmatprep.subr.bf16.mxu0 0
      %440 = vmatpush2.bf16.msra.mxu0 0
      %441 = vmatprep.subr.bf16.mxu0 0
      %442 = vmatpush2.bf16.msra.mxu0 0
      %443 = vmatprep.subr.bf16.mxu0 0
      %444 = vmatpush2.bf16.msra.mxu0 0
      %445 = vmatprep.mubr.bf16.mxu0 0
      %446 = vmatmul.mubr.bf16.gmra.mxu0 %v347
      %v447 = vpop.f32.mrf.mxu0
      %v448 = vadd.f32 0.0, %v447
      %v449 = vpop.f32.mrf.mxu0
      %v450 = vpop.f32.mrf.mxu0
      %v451 = vadd.f32 0.0, %v450
      %v452 = vpop.f32.mrf.mxu0
      %453 = vmatprep.mubr.bf16.mxu0 0
      %454 = vmatmul.mubr.bf16.gmra.mxu0 %v350
      %v455 = vpop.f32.mrf.mxu0
      %v456 = vadd.f32 0.0, %v455
      %v457 = vpop.f32.mrf.mxu0
      %v458 = vpop.f32.mrf.mxu0
      %v459 = vadd.f32 0.0, %v458
      %v460 = vpop.f32.mrf.mxu0
      %461 = vmatprep.mubr.bf16.mxu0 0
      %462 = vmatmul.mubr.bf16.gmra.mxu0 %v353
      %v463 = vpop.f32.mrf.mxu0
      %v464 = vadd.f32 0.0, %v463
      %v465 = vpop.f32.mrf.mxu0
      %v466 = vpop.f32.mrf.mxu0
      %v467 = vadd.f32 0.0, %v466
      %v468 = vpop.f32.mrf.mxu0
      %469 = vmatprep.mubr.bf16.mxu0 0
      %470 = vmatmul.mubr.bf16.gmra.mxu0 %v356
      %v471 = vpop.f32.mrf.mxu0
      %v472 = vadd.f32 0.0, %v471
      %v473 = vpop.f32.mrf.mxu0
      %v474 = vpop.f32.mrf.mxu0
      %v475 = vadd.f32 0.0, %v474
      %v476 = vpop.f32.mrf.mxu0
      %477 = vmatprep.mubr.bf16.mxu0 0
      %478 = vmatmul.mubr.bf16.gmra.mxu0 %v359
      %v479 = vpop.f32.mrf.mxu0
      %v480 = vadd.f32 0.0, %v479
      %v481 = vpop.f32.mrf.mxu0
      %v482 = vpop.f32.mrf.mxu0
      %v483 = vadd.f32 0.0, %v482
      %v484 = vpop.f32.mrf.mxu0
      %485 = vmatprep.mubr.bf16.mxu0 0
      %486 = vmatmul.mubr.bf16.gmra.mxu0 %v362
      %v487 = vpop.f32.mrf.mxu0
      %v488 = vadd.f32 0.0, %v487
      %v489 = vpop.f32.mrf.mxu0
      %v490 = vpop.f32.mrf.mxu0
      %v491 = vadd.f32 0.0, %v490
      %v492 = vpop.f32.mrf.mxu0
      %493 = vmatprep.mubr.bf16.mxu0 0
      %494 = vmatmul.mubr.bf16.gmra.mxu0 %v365
      %v495 = vpop.f32.mrf.mxu0
      %v496 = vadd.f32 0.0, %v495
      %v497 = vpop.f32.mrf.mxu0
      %v498 = vpop.f32.mrf.mxu0
      %v499 = vadd.f32 0.0, %v498
      %v500 = vpop.f32.mrf.mxu0
      %501 = vmatprep.mubr.bf16.mxu0 0
      %502 = vmatmul.mubr.bf16.gmra.mxu0 %v368
      %v503 = vpop.f32.mrf.mxu0
      %v504 = vadd.f32 0.0, %v503
      %v505 = vpop.f32.mrf.mxu0
      %v506 = vpop.f32.mrf.mxu0
      %v507 = vadd.f32 0.0, %v506
      %v508 = vpop.f32.mrf.mxu0
      %509 = vmatprep.mubr.bf16.mxu0 0
      %510 = vmatmul.mubr.bf16.gmra.mxu0 %v371
      %v511 = vpop.f32.mrf.mxu0
      %v512 = vadd.f32 0.0, %v511
      %v513 = vpop.f32.mrf.mxu0
      %v514 = vpop.f32.mrf.mxu0
      %v515 = vadd.f32 0.0, %v514
      %v516 = vpop.f32.mrf.mxu0
      %517 = vmatprep.mubr.bf16.mxu0 0
      %518 = vmatmul.mubr.bf16.gmra.mxu0 %v374
      %v519 = vpop.f32.mrf.mxu0
      %v520 = vadd.f32 0.0, %v519
      %v521 = vpop.f32.mrf.mxu0
      %v522 = vpop.f32.mrf.mxu0
      %v523 = vadd.f32 0.0, %v522
      %v524 = vpop.f32.mrf.mxu0
      %525 = vmatprep.mubr.bf16.mxu0 0
      %526 = vmatmul.mubr.bf16.gmra.mxu0 %v377
      %v527 = vpop.f32.mrf.mxu0
      %v528 = vadd.f32 0.0, %v527
      %v529 = vpop.f32.mrf.mxu0
      %v530 = vpop.f32.mrf.mxu0
      %v531 = vadd.f32 0.0, %v530
      %v532 = vpop.f32.mrf.mxu0
      %533 = vmatprep.mubr.bf16.mxu0 0
      %534 = vmatmul.mubr.bf16.gmra.mxu0 %v380
      %v535 = vpop.f32.mrf.mxu0
      %v536 = vadd.f32 0.0, %v535
      %v537 = vpop.f32.mrf.mxu0
      %v538 = vpop.f32.mrf.mxu0
      %v539 = vadd.f32 0.0, %v538
      %v540 = vpop.f32.mrf.mxu0
      %541 = vmatprep.mubr.bf16.mxu0 0
      %542 = vmatmul.mubr.bf16.gmra.mxu0 %v383
      %v543 = vpop.f32.mrf.mxu0
      %v544 = vadd.f32 0.0, %v543
      %v545 = vpop.f32.mrf.mxu0
      %v546 = vpop.f32.mrf.mxu0
      %v547 = vadd.f32 0.0, %v546
      %v548 = vpop.f32.mrf.mxu0
      %549 = vmatprep.mubr.bf16.mxu0 0
      %550 = vmatmul.mubr.bf16.gmra.mxu0 %v386
      %v551 = vpop.f32.mrf.mxu0
      %v552 = vadd.f32 0.0, %v551
      %v553 = vpop.f32.mrf.mxu0
      %v554 = vpop.f32.mrf.mxu0
      %v555 = vadd.f32 0.0, %v554
      %v556 = vpop.f32.mrf.mxu0
      %557 = vmatprep.mubr.bf16.mxu0 0
      %558 = vmatmul.mubr.bf16.gmra.mxu0 %v389
      %v559 = vpop.f32.mrf.mxu0
      %v560 = vadd.f32 0.0, %v559
      %v561 = vpop.f32.mrf.mxu0
      %v562 = vpop.f32.mrf.mxu0
      %v563 = vadd.f32 0.0, %v562
      %v564 = vpop.f32.mrf.mxu0
      %565 = vmatprep.mubr.bf16.mxu0 0
      %566 = vmatmul.mubr.bf16.gmra.mxu0 %v392
      %v567 = vpop.f32.mrf.mxu0
      %v568 = vadd.f32 0.0, %v567
      %v569 = vpop.f32.mrf.mxu0
      %v570 = vpop.f32.mrf.mxu0
      %v571 = vadd.f32 0.0, %v570
      %v572 = vpop.f32.mrf.mxu0
      %573 = vmatprep.mubr.bf16.mxu0 0
      %574 = vmatmul.mubr.bf16.gmra.mxu0 %v395
      %v575 = vpop.f32.mrf.mxu0
      %v576 = vadd.f32 0.0, %v575
      %v577 = vpop.f32.mrf.mxu0
      %v578 = vpop.f32.mrf.mxu0
      %v579 = vadd.f32 0.0, %v578
      %v580 = vpop.f32.mrf.mxu0
      %581 = vmatprep.mubr.bf16.mxu0 0
      %582 = vmatmul.mubr.bf16.gmra.mxu0 %v398
      %v583 = vpop.f32.mrf.mxu0
      %v584 = vadd.f32 0.0, %v583
      %v585 = vpop.f32.mrf.mxu0
      %v586 = vpop.f32.mrf.mxu0
      %v587 = vadd.f32 0.0, %v586
      %v588 = vpop.f32.mrf.mxu0
      %589 = vmatprep.mubr.bf16.mxu0 0
      %590 = vmatmul.mubr.bf16.gmra.mxu0 %v401
      %v591 = vpop.f32.mrf.mxu0
      %v592 = vadd.f32 0.0, %v591
      %v593 = vpop.f32.mrf.mxu0
      %v594 = vpop.f32.mrf.mxu0
      %v595 = vadd.f32 0.0, %v594
      %v596 = vpop.f32.mrf.mxu0
      %597 = vmatprep.mubr.bf16.mxu0 0
      %598 = vmatmul.mubr.bf16.gmra.mxu0 %v404
      %v599 = vpop.f32.mrf.mxu0
      %v600 = vadd.f32 0.0, %v599
      %v601 = vpop.f32.mrf.mxu0
      %v602 = vpop.f32.mrf.mxu0
      %v603 = vadd.f32 0.0, %v602
      %v604 = vpop.f32.mrf.mxu0
      %605 = vmatprep.mubr.bf16.mxu0 0
      %606 = vmatmul.mubr.bf16.gmra.mxu0 %v407
      %v607 = vpop.f32.mrf.mxu0
      %v608 = vadd.f32 0.0, %v607
      %v609 = vpop.f32.mrf.mxu0
      %v610 = vpop.f32.mrf.mxu0
      %v611 = vpop.f32.mrf.mxu0
      %612 = vdwg.mxu0
      %v613 = vadd.f32 %v448, 0.0
      %v614 = vadd.f32 %v451, 0.0
      %v615 = vadd.f32 %v456, 0.0
      %v616 = vadd.f32 %v459, 0.0
      %v617 = vadd.f32 %v464, 0.0
      %v618 = vadd.f32 %v467, 0.0
      %v619 = vadd.f32 %v472, 0.0
      %v620 = vadd.f32 %v475, 0.0
      %v621 = vadd.f32 %v480, 0.0
      %v622 = vadd.f32 %v483, 0.0
      %v623 = vadd.f32 %v488, 0.0
      %v624 = vadd.f32 %v491, 0.0
      %v625 = vadd.f32 %v496, 0.0
      %v626 = vadd.f32 %v499, 0.0
      %v627 = vadd.f32 %v504, 0.0
      %v628 = vadd.f32 %v507, 0.0
      %v629 = vadd.f32 %v512, 0.0
      %v630 = vadd.f32 %v515, 0.0
      %v631 = vadd.f32 %v520, 0.0
      %v632 = vadd.f32 %v523, 0.0
      %v633 = vadd.f32 %v528, 0.0
      %v634 = vadd.f32 %v531, 0.0
      %v635 = vadd.f32 %v536, 0.0
      %v636 = vadd.f32 %v539, 0.0
      %v637 = vadd.f32 %v544, 0.0
      %v638 = vadd.f32 %v547, 0.0
      %v639 = vadd.f32 %v552, 0.0
      %v640 = vadd.f32 %v555, 0.0
      %v641 = vadd.f32 %v560, 0.0
      %v642 = vadd.f32 %v563, 0.0
      %v643 = vadd.f32 %v568, 0.0
      %v644 = vadd.f32 %v571, 0.0
      %v645 = vadd.f32 %v576, 0.0
      %v646 = vadd.f32 %v579, 0.0
      %v647 = vadd.f32 %v584, 0.0
      %v648 = vadd.f32 %v587, 0.0
      %vm686 = vcmask 1046528
      %v687 = vrot.slane %v448, 1
      %v688 = vrot.slane %v451, 1
      %v689 = vsel %vm686, %v687, %v688
      %v690 = vrot.slane %v456, 1
      %v691 = vsel %vm686, %v688, %v690
      %v692 = vrot.slane %v459, 1
      %v693 = vsel %vm686, %v690, %v692
      %v694 = vrot.slane %v464, 1
      %v695 = vsel %vm686, %v692, %v694
      %v696 = vrot.slane %v467, 1
      %v697 = vsel %vm686, %v694, %v696
      %v698 = vrot.slane %v472, 1
      %v699 = vsel %vm686, %v696, %v698
      %v700 = vrot.slane %v475, 1
      %v701 = vsel %vm686, %v698, %v700
      %v702 = vrot.slane %v480, 1
      %v703 = vsel %vm686, %v700, %v702
      %v704 = vrot.slane %v483, 1
      %v705 = vsel %vm686, %v702, %v704
      %v706 = vrot.slane %v488, 1
      %v707 = vsel %vm686, %v704, %v706
      %v708 = vrot.slane %v491, 1
      %v709 = vsel %vm686, %v706, %v708
      %v710 = vrot.slane %v496, 1
      %v711 = vsel %vm686, %v708, %v710
      %v712 = vrot.slane %v499, 1
      %v713 = vsel %vm686, %v710, %v712
      %v714 = vrot.slane %v504, 1
      %v715 = vsel %vm686, %v712, %v714
      %v716 = vrot.slane %v507, 1
      %v717 = vsel %vm686, %v714, %v716
      %v718 = vrot.slane %v512, 1
      %v719 = vsel %vm686, %v716, %v718
      %v720 = vrot.slane %v515, 1
      %v721 = vsel %vm686, %v718, %v720
      %v722 = vrot.slane %v520, 1
      %v723 = vsel %vm686, %v720, %v722
      %v724 = vrot.slane %v523, 1
      %v725 = vsel %vm686, %v722, %v724
      %v726 = vrot.slane %v528, 1
      %v727 = vsel %vm686, %v724, %v726
      %v728 = vrot.slane %v531, 1
      %v729 = vsel %vm686, %v726, %v728
      %v730 = vrot.slane %v536, 1
      %v731 = vsel %vm686, %v728, %v730
      %v732 = vrot.slane %v539, 1
      %v733 = vsel %vm686, %v730, %v732
      %v734 = vrot.slane %v544, 1
      %v735 = vsel %vm686, %v732, %v734
      %v736 = vrot.slane %v547, 1
      %v737 = vsel %vm686, %v734, %v736
      %v738 = vrot.slane %v552, 1
      %v739 = vsel %vm686, %v736, %v738
      %v740 = vrot.slane %v555, 1
      %v741 = vsel %vm686, %v738, %v740
      %v742 = vrot.slane %v560, 1
      %v743 = vsel %vm686, %v740, %v742
      %v744 = vrot.slane %v563, 1
      %v745 = vsel %vm686, %v742, %v744
      %v746 = vrot.slane %v568, 1
      %v747 = vsel %vm686, %v744, %v746
      %v748 = vrot.slane %v571, 1
      %v749 = vsel %vm686, %v746, %v748
      %v750 = vrot.slane %v576, 1
      %v751 = vsel %vm686, %v748, %v750
      %v752 = vrot.slane %v579, 1
      %v753 = vsel %vm686, %v750, %v752
      %v754 = vrot.slane %v584, 1
      %v755 = vsel %vm686, %v752, %v754
      %v756 = vrot.slane %v587, 1
      %v757 = vsel %vm686, %v754, %v756
      %v758 = vrot.slane %v592, 1
      %v759 = vsel %vm686, %v756, %v758
      %760 = vrot.lane.b32.xlu0 %v689, 124
      %v761 = vpop.permute.xlu0 %760
      %762 = vrot.lane.b32.xlu0 %v691, 124
      %v763 = vpop.permute.xlu0 %762
      %764 = vrot.lane.b32.xlu0 %v693, 124
      %v765 = vpop.permute.xlu0 %764
      %766 = vrot.lane.b32.xlu0 %v695, 124
      %v767 = vpop.permute.xlu0 %766
      %768 = vrot.lane.b32.xlu0 %v697, 124
      %v769 = vpop.permute.xlu0 %768
      %770 = vrot.lane.b32.xlu0 %v699, 124
      %v771 = vpop.permute.xlu0 %770
      %772 = vrot.lane.b32.xlu0 %v701, 124
      %v773 = vpop.permute.xlu0 %772
      %774 = vrot.lane.b32.xlu0 %v703, 124
      %v775 = vpop.permute.xlu0 %774
      %776 = vrot.lane.b32.xlu0 %v705, 124
      %v777 = vpop.permute.xlu0 %776
      %778 = vrot.lane.b32.xlu0 %v707, 124
      %v779 = vpop.permute.xlu0 %778
      %780 = vrot.lane.b32.xlu0 %v709, 124
      %v781 = vpop.permute.xlu0 %780
      %782 = vrot.lane.b32.xlu0 %v711, 124
      %v783 = vpop.permute.xlu0 %782
      %784 = vrot.lane.b32.xlu0 %v713, 124
      %v785 = vpop.permute.xlu0 %784
      %786 = vrot.lane.b32.xlu0 %v715, 124
      %v787 = vpop.permute.xlu0 %786
      %788 = vrot.lane.b32.xlu0 %v717, 124
      %v789 = vpop.permute.xlu0 %788
      %790 = vrot.lane.b32.xlu0 %v719, 124
      %v791 = vpop.permute.xlu0 %790
      %792 = vrot.lane.b32.xlu0 %v721, 124
      %v793 = vpop.permute.xlu0 %792
      %794 = vrot.lane.b32.xlu0 %v723, 124
      %v795 = vpop.permute.xlu0 %794
      %796 = vrot.lane.b32.xlu0 %v725, 124
      %v797 = vpop.permute.xlu0 %796
      %798 = vrot.lane.b32.xlu0 %v727, 124
      %v799 = vpop.permute.xlu0 %798
      %800 = vrot.lane.b32.xlu0 %v729, 124
      %v801 = vpop.permute.xlu0 %800
      %802 = vrot.lane.b32.xlu0 %v731, 124
      %v803 = vpop.permute.xlu0 %802
      %804 = vrot.lane.b32.xlu0 %v733, 124
      %v805 = vpop.permute.xlu0 %804
      %806 = vrot.lane.b32.xlu0 %v735, 124
      %v807 = vpop.permute.xlu0 %806
      %808 = vrot.lane.b32.xlu0 %v737, 124
      %v809 = vpop.permute.xlu0 %808
      %810 = vrot.lane.b32.xlu0 %v739, 124
      %v811 = vpop.permute.xlu0 %810
      %812 = vrot.lane.b32.xlu0 %v741, 124
      %v813 = vpop.permute.xlu0 %812
      %814 = vrot.lane.b32.xlu0 %v743, 124
      %v815 = vpop.permute.xlu0 %814
      %816 = vrot.lane.b32.xlu0 %v745, 124
      %v817 = vpop.permute.xlu0 %816
      %818 = vrot.lane.b32.xlu0 %v747, 124
      %v819 = vpop.permute.xlu0 %818
      %820 = vrot.lane.b32.xlu0 %v749, 124
      %v821 = vpop.permute.xlu0 %820
      %822 = vrot.lane.b32.xlu0 %v751, 124
      %v823 = vpop.permute.xlu0 %822
      %824 = vrot.lane.b32.xlu0 %v753, 124
      %v825 = vpop.permute.xlu0 %824
      %826 = vrot.lane.b32.xlu0 %v755, 124
      %v827 = vpop.permute.xlu0 %826
      %828 = vrot.lane.b32.xlu0 %v757, 124
      %v829 = vpop.permute.xlu0 %828
      %830 = vrot.lane.b32.xlu0 %v759, 124
      %v831 = vpop.permute.xlu0 %830
      %v868 = vadd.f32 %v613, %v761
      %v869 = vadd.f32 %v614, %v763
      %v870 = vadd.f32 %v615, %v765
      %v871 = vadd.f32 %v616, %v767
      %v872 = vadd.f32 %v617, %v769
      %v873 = vadd.f32 %v618, %v771
      %v874 = vadd.f32 %v619, %v773
      %v875 = vadd.f32 %v620, %v775
      %v876 = vadd.f32 %v621, %v777
      %v877 = vadd.f32 %v622, %v779
      %v878 = vadd.f32 %v623, %v781
      %v879 = vadd.f32 %v624, %v783
      %v880 = vadd.f32 %v625, %v785
      %v881 = vadd.f32 %v626, %v787
      %v882 = vadd.f32 %v627, %v789
      %v883 = vadd.f32 %v628, %v791
      %v884 = vadd.f32 %v629, %v793
      %v885 = vadd.f32 %v630, %v795
      %v886 = vadd.f32 %v631, %v797
      %v887 = vadd.f32 %v632, %v799
      %v888 = vadd.f32 %v633, %v801
      %v889 = vadd.f32 %v634, %v803
      %v890 = vadd.f32 %v635, %v805
      %v891 = vadd.f32 %v636, %v807
      %v892 = vadd.f32 %v637, %v809
      %v893 = vadd.f32 %v638, %v811
      %v894 = vadd.f32 %v639, %v813
      %v895 = vadd.f32 %v640, %v815
      %v896 = vadd.f32 %v641, %v817
      %v897 = vadd.f32 %v642, %v819
      %v898 = vadd.f32 %v643, %v821
      %v899 = vadd.f32 %v644, %v823
      %v900 = vadd.f32 %v645, %v825
      %v901 = vadd.f32 %v646, %v827
      %v902 = vadd.f32 %v647, %v829
      %v903 = vadd.f32 %v648, %v831
      %vm904 = vcmask 1045504
      %v905 = vrot.slane %v448, 2
      %v906 = vrot.slane %v451, 2
      %v907 = vsel %vm904, %v905, %v906
      %v908 = vrot.slane %v456, 2
      %v909 = vsel %vm904, %v906, %v908
      %v910 = vrot.slane %v459, 2
      %v911 = vsel %vm904, %v908, %v910
      %v912 = vrot.slane %v464, 2
      %v913 = vsel %vm904, %v910, %v912
      %v914 = vrot.slane %v467, 2
      %v915 = vsel %vm904, %v912, %v914
      %v916 = vrot.slane %v472, 2
      %v917 = vsel %vm904, %v914, %v916
      %v918 = vrot.slane %v475, 2
      %v919 = vsel %vm904, %v916, %v918
      %v920 = vrot.slane %v480, 2
      %v921 = vsel %vm904, %v918, %v920
      %v922 = vrot.slane %v483, 2
      %v923 = vsel %vm904, %v920, %v922
      %v924 = vrot.slane %v488, 2
      %v925 = vsel %vm904, %v922, %v924
      %v926 = vrot.slane %v491, 2
      %v927 = vsel %vm904, %v924, %v926
      %v928 = vrot.slane %v496, 2
      %v929 = vsel %vm904, %v926, %v928
      %v930 = vrot.slane %v499, 2
      %v931 = vsel %vm904, %v928, %v930
      %v932 = vrot.slane %v504, 2
      %v933 = vsel %vm904, %v930, %v932
      %v934 = vrot.slane %v507, 2
      %v935 = vsel %vm904, %v932, %v934
      %v936 = vrot.slane %v512, 2
      %v937 = vsel %vm904, %v934, %v936
      %v938 = vrot.slane %v515, 2
      %v939 = vsel %vm904, %v936, %v938
      %v940 = vrot.slane %v520, 2
      %v941 = vsel %vm904, %v938, %v940
      %v942 = vrot.slane %v523, 2
      %v943 = vsel %vm904, %v940, %v942
      %v944 = vrot.slane %v528, 2
      %v945 = vsel %vm904, %v942, %v944
      %v946 = vrot.slane %v531, 2
      %v947 = vsel %vm904, %v944, %v946
      %v948 = vrot.slane %v536, 2
      %v949 = vsel %vm904, %v946, %v948
      %v950 = vrot.slane %v539, 2
      %v951 = vsel %vm904, %v948, %v950
      %v952 = vrot.slane %v544, 2
      %v953 = vsel %vm904, %v950, %v952
      %v954 = vrot.slane %v547, 2
      %v955 = vsel %vm904, %v952, %v954
      %v956 = vrot.slane %v552, 2
      %v957 = vsel %vm904, %v954, %v956
      %v958 = vrot.slane %v555, 2
      %v959 = vsel %vm904, %v956, %v958
      %v960 = vrot.slane %v560, 2
      %v961 = vsel %vm904, %v958, %v960
      %v962 = vrot.slane %v563, 2
      %v963 = vsel %vm904, %v960, %v962
      %v964 = vrot.slane %v568, 2
      %v965 = vsel %vm904, %v962, %v964
      %v966 = vrot.slane %v571, 2
      %v967 = vsel %vm904, %v964, %v966
      %v968 = vrot.slane %v576, 2
      %v969 = vsel %vm904, %v966, %v968
      %v970 = vrot.slane %v579, 2
      %v971 = vsel %vm904, %v968, %v970
      %v972 = vrot.slane %v584, 2
      %v973 = vsel %vm904, %v970, %v972
      %v974 = vrot.slane %v587, 2
      %v975 = vsel %vm904, %v972, %v974
      %v976 = vrot.slane %v592, 2
      %v977 = vsel %vm904, %v974, %v976
      %978 = vrot.lane.b32.xlu0 %v907, 120
      %v979 = vpop.permute.xlu0 %978
      %980 = vrot.lane.b32.xlu0 %v909, 120
      %v981 = vpop.permute.xlu0 %980
      %982 = vrot.lane.b32.xlu0 %v911, 120
      %v983 = vpop.permute.xlu0 %982
      %984 = vrot.lane.b32.xlu0 %v913, 120
      %v985 = vpop.permute.xlu0 %984
      %986 = vrot.lane.b32.xlu0 %v915, 120
      %v987 = vpop.permute.xlu0 %986
      %988 = vrot.lane.b32.xlu0 %v917, 120
      %v989 = vpop.permute.xlu0 %988
      %990 = vrot.lane.b32.xlu0 %v919, 120
      %v991 = vpop.permute.xlu0 %990
      %992 = vrot.lane.b32.xlu0 %v921, 120
      %v993 = vpop.permute.xlu0 %992
      %994 = vrot.lane.b32.xlu0 %v923, 120
      %v995 = vpop.permute.xlu0 %994
      %996 = vrot.lane.b32.xlu0 %v925, 120
      %v997 = vpop.permute.xlu0 %996
      %998 = vrot.lane.b32.xlu0 %v927, 120
      %v999 = vpop.permute.xlu0 %998
      %1000 = vrot.lane.b32.xlu0 %v929, 120
      %v1001 = vpop.permute.xlu0 %1000
      %1002 = vrot.lane.b32.xlu0 %v931, 120
      %v1003 = vpop.permute.xlu0 %1002
      %1004 = vrot.lane.b32.xlu0 %v933, 120
      %v1005 = vpop.permute.xlu0 %1004
      %1006 = vrot.lane.b32.xlu0 %v935, 120
      %v1007 = vpop.permute.xlu0 %1006
      %1008 = vrot.lane.b32.xlu0 %v937, 120
      %v1009 = vpop.permute.xlu0 %1008
      %1010 = vrot.lane.b32.xlu0 %v939, 120
      %v1011 = vpop.permute.xlu0 %1010
      %1012 = vrot.lane.b32.xlu0 %v941, 120
      %v1013 = vpop.permute.xlu0 %1012
      %1014 = vrot.lane.b32.xlu0 %v943, 120
      %v1015 = vpop.permute.xlu0 %1014
      %1016 = vrot.lane.b32.xlu0 %v945, 120
      %v1017 = vpop.permute.xlu0 %1016
      %1018 = vrot.lane.b32.xlu0 %v947, 120
      %v1019 = vpop.permute.xlu0 %1018
      %1020 = vrot.lane.b32.xlu0 %v949, 120
      %v1021 = vpop.permute.xlu0 %1020
      %1022 = vrot.lane.b32.xlu0 %v951, 120
      %v1023 = vpop.permute.xlu0 %1022
      %1024 = vrot.lane.b32.xlu0 %v953, 120
      %v1025 = vpop.permute.xlu0 %1024
      %1026 = vrot.lane.b32.xlu0 %v955, 120
      %v1027 = vpop.permute.xlu0 %1026
      %1028 = vrot.lane.b32.xlu0 %v957, 120
      %v1029 = vpop.permute.xlu0 %1028
      %1030 = vrot.lane.b32.xlu0 %v959, 120
      %v1031 = vpop.permute.xlu0 %1030
      %1032 = vrot.lane.b32.xlu0 %v961, 120
      %v1033 = vpop.permute.xlu0 %1032
      %1034 = vrot.lane.b32.xlu0 %v963, 120
      %v1035 = vpop.permute.xlu0 %1034
      %1036 = vrot.lane.b32.xlu0 %v965, 120
      %v1037 = vpop.permute.xlu0 %1036
      %1038 = vrot.lane.b32.xlu0 %v967, 120
      %v1039 = vpop.permute.xlu0 %1038
      %1040 = vrot.lane.b32.xlu0 %v969, 120
      %v1041 = vpop.permute.xlu0 %1040
      %1042 = vrot.lane.b32.xlu0 %v971, 120
      %v1043 = vpop.permute.xlu0 %1042
      %1044 = vrot.lane.b32.xlu0 %v973, 120
      %v1045 = vpop.permute.xlu0 %1044
      %1046 = vrot.lane.b32.xlu0 %v975, 120
      %v1047 = vpop.permute.xlu0 %1046
      %1048 = vrot.lane.b32.xlu0 %v977, 120
      %v1049 = vpop.permute.xlu0 %1048
      %v1086 = vadd.f32 %v868, %v979
      %v1087 = vadd.f32 %v869, %v981
      %v1088 = vadd.f32 %v870, %v983
      %v1089 = vadd.f32 %v871, %v985
      %v1090 = vadd.f32 %v872, %v987
      %v1091 = vadd.f32 %v873, %v989
      %v1092 = vadd.f32 %v874, %v991
      %v1093 = vadd.f32 %v875, %v993
      %v1094 = vadd.f32 %v876, %v995
      %v1095 = vadd.f32 %v877, %v997
      %v1096 = vadd.f32 %v878, %v999
      %v1097 = vadd.f32 %v879, %v1001
      %v1098 = vadd.f32 %v880, %v1003
      %v1099 = vadd.f32 %v881, %v1005
      %v1100 = vadd.f32 %v882, %v1007
      %v1101 = vadd.f32 %v883, %v1009
      %v1102 = vadd.f32 %v884, %v1011
      %v1103 = vadd.f32 %v885, %v1013
      %v1104 = vadd.f32 %v886, %v1015
      %v1105 = vadd.f32 %v887, %v1017
      %v1106 = vadd.f32 %v888, %v1019
      %v1107 = vadd.f32 %v889, %v1021
      %v1108 = vadd.f32 %v890, %v1023
      %v1109 = vadd.f32 %v891, %v1025
      %v1110 = vadd.f32 %v892, %v1027
      %v1111 = vadd.f32 %v893, %v1029
      %v1112 = vadd.f32 %v894, %v1031
      %v1113 = vadd.f32 %v895, %v1033
      %v1114 = vadd.f32 %v896, %v1035
      %v1115 = vadd.f32 %v897, %v1037
      %v1116 = vadd.f32 %v898, %v1039
      %v1117 = vadd.f32 %v899, %v1041
      %v1118 = vadd.f32 %v900, %v1043
      %v1119 = vadd.f32 %v901, %v1045
      %v1120 = vadd.f32 %v902, %v1047
      %v1121 = vadd.f32 %v903, %v1049
      %v1124 = vrot.slane %v595, 2
      %v1125 = vsel %vm904, %v976, %v1124
      %v1126 = vrot.slane %v600, 2
      %v1127 = vsel %vm904, %v1124, %v1126
      %1128 = vrot.lane.b32.xlu0 %v911, 116
      %v1129 = vpop.permute.xlu0 %1128
      %1130 = vrot.lane.b32.xlu0 %v913, 116
      %v1131 = vpop.permute.xlu0 %1130
      %1132 = vrot.lane.b32.xlu0 %v915, 116
      %v1133 = vpop.permute.xlu0 %1132
      %1134 = vrot.lane.b32.xlu0 %v917, 116
      %v1135 = vpop.permute.xlu0 %1134
      %1136 = vrot.lane.b32.xlu0 %v919, 116
      %v1137 = vpop.permute.xlu0 %1136
      %1138 = vrot.lane.b32.xlu0 %v921, 116
      %v1139 = vpop.permute.xlu0 %1138
      %1140 = vrot.lane.b32.xlu0 %v923, 116
      %v1141 = vpop.permute.xlu0 %1140
      %1142 = vrot.lane.b32.xlu0 %v925, 116
      %v1143 = vpop.permute.xlu0 %1142
      %1144 = vrot.lane.b32.xlu0 %v927, 116
      %v1145 = vpop.permute.xlu0 %1144
      %1146 = vrot.lane.b32.xlu0 %v929, 116
      %v1147 = vpop.permute.xlu0 %1146
      %1148 = vrot.lane.b32.xlu0 %v931, 116
      %v1149 = vpop.permute.xlu0 %1148
      %1150 = vrot.lane.b32.xlu0 %v933, 116
      %v1151 = vpop.permute.xlu0 %1150
      %1152 = vrot.lane.b32.xlu0 %v935, 116
      %v1153 = vpop.permute.xlu0 %1152
      %1154 = vrot.lane.b32.xlu0 %v937, 116
      %v1155 = vpop.permute.xlu0 %1154
      %1156 = vrot.lane.b32.xlu0 %v939, 116
      %v1157 = vpop.permute.xlu0 %1156
      %1158 = vrot.lane.b32.xlu0 %v941, 116
      %v1159 = vpop.permute.xlu0 %1158
      %1160 = vrot.lane.b32.xlu0 %v943, 116
      %v1161 = vpop.permute.xlu0 %1160
      %1162 = vrot.lane.b32.xlu0 %v945, 116
      %v1163 = vpop.permute.xlu0 %1162
      %1164 = vrot.lane.b32.xlu0 %v947, 116
      %v1165 = vpop.permute.xlu0 %1164
      %1166 = vrot.lane.b32.xlu0 %v949, 116
      %v1167 = vpop.permute.xlu0 %1166
      %1168 = vrot.lane.b32.xlu0 %v951, 116
      %v1169 = vpop.permute.xlu0 %1168
      %1170 = vrot.lane.b32.xlu0 %v953, 116
      %v1171 = vpop.permute.xlu0 %1170
      %1172 = vrot.lane.b32.xlu0 %v955, 116
      %v1173 = vpop.permute.xlu0 %1172
      %1174 = vrot.lane.b32.xlu0 %v957, 116
      %v1175 = vpop.permute.xlu0 %1174
      %1176 = vrot.lane.b32.xlu0 %v959, 116
      %v1177 = vpop.permute.xlu0 %1176
      %1178 = vrot.lane.b32.xlu0 %v961, 116
      %v1179 = vpop.permute.xlu0 %1178
      %1180 = vrot.lane.b32.xlu0 %v963, 116
      %v1181 = vpop.permute.xlu0 %1180
      %1182 = vrot.lane.b32.xlu0 %v965, 116
      %v1183 = vpop.permute.xlu0 %1182
      %1184 = vrot.lane.b32.xlu0 %v967, 116
      %v1185 = vpop.permute.xlu0 %1184
      %1186 = vrot.lane.b32.xlu0 %v969, 116
      %v1187 = vpop.permute.xlu0 %1186
      %1188 = vrot.lane.b32.xlu0 %v971, 116
      %v1189 = vpop.permute.xlu0 %1188
      %1190 = vrot.lane.b32.xlu0 %v973, 116
      %v1191 = vpop.permute.xlu0 %1190
      %1192 = vrot.lane.b32.xlu0 %v975, 116
      %v1193 = vpop.permute.xlu0 %1192
      %1194 = vrot.lane.b32.xlu0 %v977, 116
      %v1195 = vpop.permute.xlu0 %1194
      %1196 = vrot.lane.b32.xlu0 %v1125, 116
      %v1197 = vpop.permute.xlu0 %1196
      %1198 = vrot.lane.b32.xlu0 %v1127, 116
      %v1199 = vpop.permute.xlu0 %1198
      %v1236 = vadd.f32 %v1086, %v1129
      %v1237 = vadd.f32 %v1087, %v1131
      %v1238 = vadd.f32 %v1088, %v1133
      %v1239 = vadd.f32 %v1089, %v1135
      %v1240 = vadd.f32 %v1090, %v1137
      %v1241 = vadd.f32 %v1091, %v1139
      %v1242 = vadd.f32 %v1092, %v1141
      %v1243 = vadd.f32 %v1093, %v1143
      %v1244 = vadd.f32 %v1094, %v1145
      %v1245 = vadd.f32 %v1095, %v1147
      %v1246 = vadd.f32 %v1096, %v1149
      %v1247 = vadd.f32 %v1097, %v1151
      %v1248 = vadd.f32 %v1098, %v1153
      %v1249 = vadd.f32 %v1099, %v1155
      %v1250 = vadd.f32 %v1100, %v1157
      %v1251 = vadd.f32 %v1101, %v1159
      %v1252 = vadd.f32 %v1102, %v1161
      %v1253 = vadd.f32 %v1103, %v1163
      %v1254 = vadd.f32 %v1104, %v1165
      %v1255 = vadd.f32 %v1105, %v1167
      %v1256 = vadd.f32 %v1106, %v1169
      %v1257 = vadd.f32 %v1107, %v1171
      %v1258 = vadd.f32 %v1108, %v1173
      %v1259 = vadd.f32 %v1109, %v1175
      %v1260 = vadd.f32 %v1110, %v1177
      %v1261 = vadd.f32 %v1111, %v1179
      %v1262 = vadd.f32 %v1112, %v1181
      %v1263 = vadd.f32 %v1113, %v1183
      %v1264 = vadd.f32 %v1114, %v1185
      %v1265 = vadd.f32 %v1115, %v1187
      %v1266 = vadd.f32 %v1116, %v1189
      %v1267 = vadd.f32 %v1117, %v1191
      %v1268 = vadd.f32 %v1118, %v1193
      %v1269 = vadd.f32 %v1119, %v1195
      %v1270 = vadd.f32 %v1120, %v1197
      %v1271 = vadd.f32 %v1121, %v1199
      %vm1272 = vcmask 1044480
      %v1273 = vrot.slane %v456, 3
      %v1274 = vrot.slane %v459, 3
      %v1275 = vsel %vm1272, %v1273, %v1274
      %v1276 = vrot.slane %v464, 3
      %v1277 = vsel %vm1272, %v1274, %v1276
      %v1278 = vrot.slane %v467, 3
      %v1279 = vsel %vm1272, %v1276, %v1278
      %v1280 = vrot.slane %v472, 3
      %v1281 = vsel %vm1272, %v1278, %v1280
      %v1282 = vrot.slane %v475, 3
      %v1283 = vsel %vm1272, %v1280, %v1282
      %v1284 = vrot.slane %v480, 3
      %v1285 = vsel %vm1272, %v1282, %v1284
      %v1286 = vrot.slane %v483, 3
      %v1287 = vsel %vm1272, %v1284, %v1286
      %v1288 = vrot.slane %v488, 3
      %v1289 = vsel %vm1272, %v1286, %v1288
      %v1290 = vrot.slane %v491, 3
      %v1291 = vsel %vm1272, %v1288, %v1290
      %v1292 = vrot.slane %v496, 3
      %v1293 = vsel %vm1272, %v1290, %v1292
      %v1294 = vrot.slane %v499, 3
      %v1295 = vsel %vm1272, %v1292, %v1294
      %v1296 = vrot.slane %v504, 3
      %v1297 = vsel %vm1272, %v1294, %v1296
      %v1298 = vrot.slane %v507, 3
      %v1299 = vsel %vm1272, %v1296, %v1298
      %v1300 = vrot.slane %v512, 3
      %v1301 = vsel %vm1272, %v1298, %v1300
      %v1302 = vrot.slane %v515, 3
      %v1303 = vsel %vm1272, %v1300, %v1302
      %v1304 = vrot.slane %v520, 3
      %v1305 = vsel %vm1272, %v1302, %v1304
      %v1306 = vrot.slane %v523, 3
      %v1307 = vsel %vm1272, %v1304, %v1306
      %v1308 = vrot.slane %v528, 3
      %v1309 = vsel %vm1272, %v1306, %v1308
      %v1310 = vrot.slane %v531, 3
      %v1311 = vsel %vm1272, %v1308, %v1310
      %v1312 = vrot.slane %v536, 3
      %v1313 = vsel %vm1272, %v1310, %v1312
      %v1314 = vrot.slane %v539, 3
      %v1315 = vsel %vm1272, %v1312, %v1314
      %v1316 = vrot.slane %v544, 3
      %v1317 = vsel %vm1272, %v1314, %v1316
      %v1318 = vrot.slane %v547, 3
      %v1319 = vsel %vm1272, %v1316, %v1318
      %v1320 = vrot.slane %v552, 3
      %v1321 = vsel %vm1272, %v1318, %v1320
      %v1322 = vrot.slane %v555, 3
      %v1323 = vsel %vm1272, %v1320, %v1322
      %v1324 = vrot.slane %v560, 3
      %v1325 = vsel %vm1272, %v1322, %v1324
      %v1326 = vrot.slane %v563, 3
      %v1327 = vsel %vm1272, %v1324, %v1326
      %v1328 = vrot.slane %v568, 3
      %v1329 = vsel %vm1272, %v1326, %v1328
      %v1330 = vrot.slane %v571, 3
      %v1331 = vsel %vm1272, %v1328, %v1330
      %v1332 = vrot.slane %v576, 3
      %v1333 = vsel %vm1272, %v1330, %v1332
      %v1334 = vrot.slane %v579, 3
      %v1335 = vsel %vm1272, %v1332, %v1334
      %v1336 = vrot.slane %v584, 3
      %v1337 = vsel %vm1272, %v1334, %v1336
      %v1338 = vrot.slane %v587, 3
      %v1339 = vsel %vm1272, %v1336, %v1338
      %v1340 = vrot.slane %v592, 3
      %v1341 = vsel %vm1272, %v1338, %v1340
      %v1342 = vrot.slane %v595, 3
      %v1343 = vsel %vm1272, %v1340, %v1342
      %v1344 = vrot.slane %v600, 3
      %v1345 = vsel %vm1272, %v1342, %v1344
      %1346 = vrot.lane.b32.xlu0 %v1275, 112
      %v1347 = vpop.permute.xlu0 %1346
      %1348 = vrot.lane.b32.xlu0 %v1277, 112
      %v1349 = vpop.permute.xlu0 %1348
      %1350 = vrot.lane.b32.xlu0 %v1279, 112
      %v1351 = vpop.permute.xlu0 %1350
      %1352 = vrot.lane.b32.xlu0 %v1281, 112
      %v1353 = vpop.permute.xlu0 %1352
      %1354 = vrot.lane.b32.xlu0 %v1283, 112
      %v1355 = vpop.permute.xlu0 %1354
      %1356 = vrot.lane.b32.xlu0 %v1285, 112
      %v1357 = vpop.permute.xlu0 %1356
      %1358 = vrot.lane.b32.xlu0 %v1287, 112
      %v1359 = vpop.permute.xlu0 %1358
      %1360 = vrot.lane.b32.xlu0 %v1289, 112
      %v1361 = vpop.permute.xlu0 %1360
      %1362 = vrot.lane.b32.xlu0 %v1291, 112
      %v1363 = vpop.permute.xlu0 %1362
      %1364 = vrot.lane.b32.xlu0 %v1293, 112
      %v1365 = vpop.permute.xlu0 %1364
      %1366 = vrot.lane.b32.xlu0 %v1295, 112
      %v1367 = vpop.permute.xlu0 %1366
      %1368 = vrot.lane.b32.xlu0 %v1297, 112
      %v1369 = vpop.permute.xlu0 %1368
      %1370 = vrot.lane.b32.xlu0 %v1299, 112
      %v1371 = vpop.permute.xlu0 %1370
      %1372 = vrot.lane.b32.xlu0 %v1301, 112
      %v1373 = vpop.permute.xlu0 %1372
      %1374 = vrot.lane.b32.xlu0 %v1303, 112
      %v1375 = vpop.permute.xlu0 %1374
      %1376 = vrot.lane.b32.xlu0 %v1305, 112
      %v1377 = vpop.permute.xlu0 %1376
      %1378 = vrot.lane.b32.xlu0 %v1307, 112
      %v1379 = vpop.permute.xlu0 %1378
      %1380 = vrot.lane.b32.xlu0 %v1309, 112
      %v1381 = vpop.permute.xlu0 %1380
      %1382 = vrot.lane.b32.xlu0 %v1311, 112
      %v1383 = vpop.permute.xlu0 %1382
      %1384 = vrot.lane.b32.xlu0 %v1313, 112
      %v1385 = vpop.permute.xlu0 %1384
      %1386 = vrot.lane.b32.xlu0 %v1315, 112
      %v1387 = vpop.permute.xlu0 %1386
      %1388 = vrot.lane.b32.xlu0 %v1317, 112
      %v1389 = vpop.permute.xlu0 %1388
      %1390 = vrot.lane.b32.xlu0 %v1319, 112
      %v1391 = vpop.permute.xlu0 %1390
      %1392 = vrot.lane.b32.xlu0 %v1321, 112
      %v1393 = vpop.permute.xlu0 %1392
      %1394 = vrot.lane.b32.xlu0 %v1323, 112
      %v1395 = vpop.permute.xlu0 %1394
      %1396 = vrot.lane.b32.xlu0 %v1325, 112
      %v1397 = vpop.permute.xlu0 %1396
      %1398 = vrot.lane.b32.xlu0 %v1327, 112
      %v1399 = vpop.permute.xlu0 %1398
      %1400 = vrot.lane.b32.xlu0 %v1329, 112
      %v1401 = vpop.permute.xlu0 %1400
      %1402 = vrot.lane.b32.xlu0 %v1331, 112
      %v1403 = vpop.permute.xlu0 %1402
      %1404 = vrot.lane.b32.xlu0 %v1333, 112
      %v1405 = vpop.permute.xlu0 %1404
      %1406 = vrot.lane.b32.xlu0 %v1335, 112
      %v1407 = vpop.permute.xlu0 %1406
      %1408 = vrot.lane.b32.xlu0 %v1337, 112
      %v1409 = vpop.permute.xlu0 %1408
      %1410 = vrot.lane.b32.xlu0 %v1339, 112
      %v1411 = vpop.permute.xlu0 %1410
      %1412 = vrot.lane.b32.xlu0 %v1341, 112
      %v1413 = vpop.permute.xlu0 %1412
      %1414 = vrot.lane.b32.xlu0 %v1343, 112
      %v1415 = vpop.permute.xlu0 %1414
      %1416 = vrot.lane.b32.xlu0 %v1345, 112
      %v1417 = vpop.permute.xlu0 %1416
      %v1454 = vadd.f32 %v1236, %v1347
      %v1455 = vadd.f32 %v1237, %v1349
      %v1456 = vadd.f32 %v1238, %v1351
      %v1457 = vadd.f32 %v1239, %v1353
      %v1458 = vadd.f32 %v1240, %v1355
      %v1459 = vadd.f32 %v1241, %v1357
      %v1460 = vadd.f32 %v1242, %v1359
      %v1461 = vadd.f32 %v1243, %v1361
      %v1462 = vadd.f32 %v1244, %v1363
      %v1463 = vadd.f32 %v1245, %v1365
      %v1464 = vadd.f32 %v1246, %v1367
      %v1465 = vadd.f32 %v1247, %v1369
      %v1466 = vadd.f32 %v1248, %v1371
      %v1467 = vadd.f32 %v1249, %v1373
      %v1468 = vadd.f32 %v1250, %v1375
      %v1469 = vadd.f32 %v1251, %v1377
      %v1470 = vadd.f32 %v1252, %v1379
      %v1471 = vadd.f32 %v1253, %v1381
      %v1472 = vadd.f32 %v1254, %v1383
      %v1473 = vadd.f32 %v1255, %v1385
      %v1474 = vadd.f32 %v1256, %v1387
      %v1475 = vadd.f32 %v1257, %v1389
      %v1476 = vadd.f32 %v1258, %v1391
      %v1477 = vadd.f32 %v1259, %v1393
      %v1478 = vadd.f32 %v1260, %v1395
      %v1479 = vadd.f32 %v1261, %v1397
      %v1480 = vadd.f32 %v1262, %v1399
      %v1481 = vadd.f32 %v1263, %v1401
      %v1482 = vadd.f32 %v1264, %v1403
      %v1483 = vadd.f32 %v1265, %v1405
      %v1484 = vadd.f32 %v1266, %v1407
      %v1485 = vadd.f32 %v1267, %v1409
      %v1486 = vadd.f32 %v1268, %v1411
      %v1487 = vadd.f32 %v1269, %v1413
      %v1488 = vadd.f32 %v1270, %v1415
      %v1489 = vadd.f32 %v1271, %v1417
      %vm1490 = vcmask 1043456
      %v1491 = vrot.slane %v456, 4
      %v1492 = vrot.slane %v459, 4
      %v1493 = vsel %vm1490, %v1491, %v1492
      %v1494 = vrot.slane %v464, 4
      %v1495 = vsel %vm1490, %v1492, %v1494
      %v1496 = vrot.slane %v467, 4
      %v1497 = vsel %vm1490, %v1494, %v1496
      %v1498 = vrot.slane %v472, 4
      %v1499 = vsel %vm1490, %v1496, %v1498
      %v1500 = vrot.slane %v475, 4
      %v1501 = vsel %vm1490, %v1498, %v1500
      %v1502 = vrot.slane %v480, 4
      %v1503 = vsel %vm1490, %v1500, %v1502
      %v1504 = vrot.slane %v483, 4
      %v1505 = vsel %vm1490, %v1502, %v1504
      %v1506 = vrot.slane %v488, 4
      %v1507 = vsel %vm1490, %v1504, %v1506
      %v1508 = vrot.slane %v491, 4
      %v1509 = vsel %vm1490, %v1506, %v1508
      %v1510 = vrot.slane %v496, 4
      %v1511 = vsel %vm1490, %v1508, %v1510
      %v1512 = vrot.slane %v499, 4
      %v1513 = vsel %vm1490, %v1510, %v1512
      %v1514 = vrot.slane %v504, 4
      %v1515 = vsel %vm1490, %v1512, %v1514
      %v1516 = vrot.slane %v507, 4
      %v1517 = vsel %vm1490, %v1514, %v1516
      %v1518 = vrot.slane %v512, 4
      %v1519 = vsel %vm1490, %v1516, %v1518
      %v1520 = vrot.slane %v515, 4
      %v1521 = vsel %vm1490, %v1518, %v1520
      %v1522 = vrot.slane %v520, 4
      %v1523 = vsel %vm1490, %v1520, %v1522
      %v1524 = vrot.slane %v523, 4
      %v1525 = vsel %vm1490, %v1522, %v1524
      %v1526 = vrot.slane %v528, 4
      %v1527 = vsel %vm1490, %v1524, %v1526
      %v1528 = vrot.slane %v531, 4
      %v1529 = vsel %vm1490, %v1526, %v1528
      %v1530 = vrot.slane %v536, 4
      %v1531 = vsel %vm1490, %v1528, %v1530
      %v1532 = vrot.slane %v539, 4
      %v1533 = vsel %vm1490, %v1530, %v1532
      %v1534 = vrot.slane %v544, 4
      %v1535 = vsel %vm1490, %v1532, %v1534
      %v1536 = vrot.slane %v547, 4
      %v1537 = vsel %vm1490, %v1534, %v1536
      %v1538 = vrot.slane %v552, 4
      %v1539 = vsel %vm1490, %v1536, %v1538
      %v1540 = vrot.slane %v555, 4
      %v1541 = vsel %vm1490, %v1538, %v1540
      %v1542 = vrot.slane %v560, 4
      %v1543 = vsel %vm1490, %v1540, %v1542
      %v1544 = vrot.slane %v563, 4
      %v1545 = vsel %vm1490, %v1542, %v1544
      %v1546 = vrot.slane %v568, 4
      %v1547 = vsel %vm1490, %v1544, %v1546
      %v1548 = vrot.slane %v571, 4
      %v1549 = vsel %vm1490, %v1546, %v1548
      %v1550 = vrot.slane %v576, 4
      %v1551 = vsel %vm1490, %v1548, %v1550
      %v1552 = vrot.slane %v579, 4
      %v1553 = vsel %vm1490, %v1550, %v1552
      %v1554 = vrot.slane %v584, 4
      %v1555 = vsel %vm1490, %v1552, %v1554
      %v1556 = vrot.slane %v587, 4
      %v1557 = vsel %vm1490, %v1554, %v1556
      %v1558 = vrot.slane %v592, 4
      %v1559 = vsel %vm1490, %v1556, %v1558
      %v1560 = vrot.slane %v595, 4
      %v1561 = vsel %vm1490, %v1558, %v1560
      %v1562 = vrot.slane %v600, 4
      %v1563 = vsel %vm1490, %v1560, %v1562
      %1564 = vrot.lane.b32.xlu0 %v1493, 108
      %v1565 = vpop.permute.xlu0 %1564
      %1566 = vrot.lane.b32.xlu0 %v1495, 108
      %v1567 = vpop.permute.xlu0 %1566
      %1568 = vrot.lane.b32.xlu0 %v1497, 108
      %v1569 = vpop.permute.xlu0 %1568
      %1570 = vrot.lane.b32.xlu0 %v1499, 108
      %v1571 = vpop.permute.xlu0 %1570
      %1572 = vrot.lane.b32.xlu0 %v1501, 108
      %v1573 = vpop.permute.xlu0 %1572
      %1574 = vrot.lane.b32.xlu0 %v1503, 108
      %v1575 = vpop.permute.xlu0 %1574
      %1576 = vrot.lane.b32.xlu0 %v1505, 108
      %v1577 = vpop.permute.xlu0 %1576
      %1578 = vrot.lane.b32.xlu0 %v1507, 108
      %v1579 = vpop.permute.xlu0 %1578
      %1580 = vrot.lane.b32.xlu0 %v1509, 108
      %v1581 = vpop.permute.xlu0 %1580
      %1582 = vrot.lane.b32.xlu0 %v1511, 108
      %v1583 = vpop.permute.xlu0 %1582
      %1584 = vrot.lane.b32.xlu0 %v1513, 108
      %v1585 = vpop.permute.xlu0 %1584
      %1586 = vrot.lane.b32.xlu0 %v1515, 108
      %v1587 = vpop.permute.xlu0 %1586
      %1588 = vrot.lane.b32.xlu0 %v1517, 108
      %v1589 = vpop.permute.xlu0 %1588
      %1590 = vrot.lane.b32.xlu0 %v1519, 108
      %v1591 = vpop.permute.xlu0 %1590
      %1592 = vrot.lane.b32.xlu0 %v1521, 108
      %v1593 = vpop.permute.xlu0 %1592
      %1594 = vrot.lane.b32.xlu0 %v1523, 108
      %v1595 = vpop.permute.xlu0 %1594
      %1596 = vrot.lane.b32.xlu0 %v1525, 108
      %v1597 = vpop.permute.xlu0 %1596
      %1598 = vrot.lane.b32.xlu0 %v1527, 108
      %v1599 = vpop.permute.xlu0 %1598
      %1600 = vrot.lane.b32.xlu0 %v1529, 108
      %v1601 = vpop.permute.xlu0 %1600
      %1602 = vrot.lane.b32.xlu0 %v1531, 108
      %v1603 = vpop.permute.xlu0 %1602
      %1604 = vrot.lane.b32.xlu0 %v1533, 108
      %v1605 = vpop.permute.xlu0 %1604
      %1606 = vrot.lane.b32.xlu0 %v1535, 108
      %v1607 = vpop.permute.xlu0 %1606
      %1608 = vrot.lane.b32.xlu0 %v1537, 108
      %v1609 = vpop.permute.xlu0 %1608
      %1610 = vrot.lane.b32.xlu0 %v1539, 108
      %v1611 = vpop.permute.xlu0 %1610
      %1612 = vrot.lane.b32.xlu0 %v1541, 108
      %v1613 = vpop.permute.xlu0 %1612
      %1614 = vrot.lane.b32.xlu0 %v1543, 108
      %v1615 = vpop.permute.xlu0 %1614
      %1616 = vrot.lane.b32.xlu0 %v1545, 108
      %v1617 = vpop.permute.xlu0 %1616
      %1618 = vrot.lane.b32.xlu0 %v1547, 108
      %v1619 = vpop.permute.xlu0 %1618
      %1620 = vrot.lane.b32.xlu0 %v1549, 108
      %v1621 = vpop.permute.xlu0 %1620
      %1622 = vrot.lane.b32.xlu0 %v1551, 108
      %v1623 = vpop.permute.xlu0 %1622
      %1624 = vrot.lane.b32.xlu0 %v1553, 108
      %v1625 = vpop.permute.xlu0 %1624
      %1626 = vrot.lane.b32.xlu0 %v1555, 108
      %v1627 = vpop.permute.xlu0 %1626
      %1628 = vrot.lane.b32.xlu0 %v1557, 108
      %v1629 = vpop.permute.xlu0 %1628
      %1630 = vrot.lane.b32.xlu0 %v1559, 108
      %v1631 = vpop.permute.xlu0 %1630
      %1632 = vrot.lane.b32.xlu0 %v1561, 108
      %v1633 = vpop.permute.xlu0 %1632
      %1634 = vrot.lane.b32.xlu0 %v1563, 108
      %v1635 = vpop.permute.xlu0 %1634
      %v1672 = vadd.f32 %v1454, %v1565
      %v1673 = vadd.f32 %v1455, %v1567
      %v1674 = vadd.f32 %v1456, %v1569
      %v1675 = vadd.f32 %v1457, %v1571
      %v1676 = vadd.f32 %v1458, %v1573
      %v1677 = vadd.f32 %v1459, %v1575
      %v1678 = vadd.f32 %v1460, %v1577
      %v1679 = vadd.f32 %v1461, %v1579
      %v1680 = vadd.f32 %v1462, %v1581
      %v1681 = vadd.f32 %v1463, %v1583
      %v1682 = vadd.f32 %v1464, %v1585
      %v1683 = vadd.f32 %v1465, %v1587
      %v1684 = vadd.f32 %v1466, %v1589
      %v1685 = vadd.f32 %v1467, %v1591
      %v1686 = vadd.f32 %v1468, %v1593
      %v1687 = vadd.f32 %v1469, %v1595
      %v1688 = vadd.f32 %v1470, %v1597
      %v1689 = vadd.f32 %v1471, %v1599
      %v1690 = vadd.f32 %v1472, %v1601
      %v1691 = vadd.f32 %v1473, %v1603
      %v1692 = vadd.f32 %v1474, %v1605
      %v1693 = vadd.f32 %v1475, %v1607
      %v1694 = vadd.f32 %v1476, %v1609
      %v1695 = vadd.f32 %v1477, %v1611
      %v1696 = vadd.f32 %v1478, %v1613
      %v1697 = vadd.f32 %v1479, %v1615
      %v1698 = vadd.f32 %v1480, %v1617
      %v1699 = vadd.f32 %v1481, %v1619
      %v1700 = vadd.f32 %v1482, %v1621
      %v1701 = vadd.f32 %v1483, %v1623
      %v1702 = vadd.f32 %v1484, %v1625
      %v1703 = vadd.f32 %v1485, %v1627
      %v1704 = vadd.f32 %v1486, %v1629
      %v1705 = vadd.f32 %v1487, %v1631
      %v1706 = vadd.f32 %v1488, %v1633
      %v1707 = vadd.f32 %v1489, %v1635
      %v1710 = vrot.slane %v603, 4
      %v1711 = vsel %vm1490, %v1562, %v1710
      %v1712 = vrot.slane %v608, 4
      %v1713 = vsel %vm1490, %v1710, %v1712
      %1714 = vrot.lane.b32.xlu0 %v1497, 104
      %v1715 = vpop.permute.xlu0 %1714
      %1716 = vrot.lane.b32.xlu0 %v1499, 104
      %v1717 = vpop.permute.xlu0 %1716
      %1718 = vrot.lane.b32.xlu0 %v1501, 104
      %v1719 = vpop.permute.xlu0 %1718
      %1720 = vrot.lane.b32.xlu0 %v1503, 104
      %v1721 = vpop.permute.xlu0 %1720
      %1722 = vrot.lane.b32.xlu0 %v1505, 104
      %v1723 = vpop.permute.xlu0 %1722
      %1724 = vrot.lane.b32.xlu0 %v1507, 104
      %v1725 = vpop.permute.xlu0 %1724
      %1726 = vrot.lane.b32.xlu0 %v1509, 104
      %v1727 = vpop.permute.xlu0 %1726
      %1728 = vrot.lane.b32.xlu0 %v1511, 104
      %v1729 = vpop.permute.xlu0 %1728
      %1730 = vrot.lane.b32.xlu0 %v1513, 104
      %v1731 = vpop.permute.xlu0 %1730
      %1732 = vrot.lane.b32.xlu0 %v1515, 104
      %v1733 = vpop.permute.xlu0 %1732
      %1734 = vrot.lane.b32.xlu0 %v1517, 104
      %v1735 = vpop.permute.xlu0 %1734
      %1736 = vrot.lane.b32.xlu0 %v1519, 104
      %v1737 = vpop.permute.xlu0 %1736
      %1738 = vrot.lane.b32.xlu0 %v1521, 104
      %v1739 = vpop.permute.xlu0 %1738
      %1740 = vrot.lane.b32.xlu0 %v1523, 104
      %v1741 = vpop.permute.xlu0 %1740
      %1742 = vrot.lane.b32.xlu0 %v1525, 104
      %v1743 = vpop.permute.xlu0 %1742
      %1744 = vrot.lane.b32.xlu0 %v1527, 104
      %v1745 = vpop.permute.xlu0 %1744
      %1746 = vrot.lane.b32.xlu0 %v1529, 104
      %v1747 = vpop.permute.xlu0 %1746
      %1748 = vrot.lane.b32.xlu0 %v1531, 104
      %v1749 = vpop.permute.xlu0 %1748
      %1750 = vrot.lane.b32.xlu0 %v1533, 104
      %v1751 = vpop.permute.xlu0 %1750
      %1752 = vrot.lane.b32.xlu0 %v1535, 104
      %v1753 = vpop.permute.xlu0 %1752
      %1754 = vrot.lane.b32.xlu0 %v1537, 104
      %v1755 = vpop.permute.xlu0 %1754
      %1756 = vrot.lane.b32.xlu0 %v1539, 104
      %v1757 = vpop.permute.xlu0 %1756
      %1758 = vrot.lane.b32.xlu0 %v1541, 104
      %v1759 = vpop.permute.xlu0 %1758
      %1760 = vrot.lane.b32.xlu0 %v1543, 104
      %v1761 = vpop.permute.xlu0 %1760
      %1762 = vrot.lane.b32.xlu0 %v1545, 104
      %v1763 = vpop.permute.xlu0 %1762
      %1764 = vrot.lane.b32.xlu0 %v1547, 104
      %v1765 = vpop.permute.xlu0 %1764
      %1766 = vrot.lane.b32.xlu0 %v1549, 104
      %v1767 = vpop.permute.xlu0 %1766
      %1768 = vrot.lane.b32.xlu0 %v1551, 104
      %v1769 = vpop.permute.xlu0 %1768
      %1770 = vrot.lane.b32.xlu0 %v1553, 104
      %v1771 = vpop.permute.xlu0 %1770
      %1772 = vrot.lane.b32.xlu0 %v1555, 104
      %v1773 = vpop.permute.xlu0 %1772
      %1774 = vrot.lane.b32.xlu0 %v1557, 104
      %v1775 = vpop.permute.xlu0 %1774
      %1776 = vrot.lane.b32.xlu0 %v1559, 104
      %v1777 = vpop.permute.xlu0 %1776
      %1778 = vrot.lane.b32.xlu0 %v1561, 104
      %v1779 = vpop.permute.xlu0 %1778
      %1780 = vrot.lane.b32.xlu0 %v1563, 104
      %v1781 = vpop.permute.xlu0 %1780
      %1782 = vrot.lane.b32.xlu0 %v1711, 104
      %v1783 = vpop.permute.xlu0 %1782
      %1784 = vrot.lane.b32.xlu0 %v1713, 104
      %v1785 = vpop.permute.xlu0 %1784
      %v1822 = vadd.f32 %v1672, %v1715
      %v1823 = vadd.f32 %v1673, %v1717
      %v1824 = vadd.f32 %v1674, %v1719
      %v1825 = vadd.f32 %v1675, %v1721
      %v1826 = vadd.f32 %v1676, %v1723
      %v1827 = vadd.f32 %v1677, %v1725
      %v1828 = vadd.f32 %v1678, %v1727
      %v1829 = vadd.f32 %v1679, %v1729
      %v1830 = vadd.f32 %v1680, %v1731
      %v1831 = vadd.f32 %v1681, %v1733
      %v1832 = vadd.f32 %v1682, %v1735
      %v1833 = vadd.f32 %v1683, %v1737
      %v1834 = vadd.f32 %v1684, %v1739
      %v1835 = vadd.f32 %v1685, %v1741
      %v1836 = vadd.f32 %v1686, %v1743
      %v1837 = vadd.f32 %v1687, %v1745
      %v1838 = vadd.f32 %v1688, %v1747
      %v1839 = vadd.f32 %v1689, %v1749
      %v1840 = vadd.f32 %v1690, %v1751
      %v1841 = vadd.f32 %v1691, %v1753
      %v1842 = vadd.f32 %v1692, %v1755
      %v1843 = vadd.f32 %v1693, %v1757
      %v1844 = vadd.f32 %v1694, %v1759
      %v1845 = vadd.f32 %v1695, %v1761
      %v1846 = vadd.f32 %v1696, %v1763
      %v1847 = vadd.f32 %v1697, %v1765
      %v1848 = vadd.f32 %v1698, %v1767
      %v1849 = vadd.f32 %v1699, %v1769
      %v1850 = vadd.f32 %v1700, %v1771
      %v1851 = vadd.f32 %v1701, %v1773
      %v1852 = vadd.f32 %v1702, %v1775
      %v1853 = vadd.f32 %v1703, %v1777
      %v1854 = vadd.f32 %v1704, %v1779
      %v1855 = vadd.f32 %v1705, %v1781
      %v1856 = vadd.f32 %v1706, %v1783
      %v1857 = vadd.f32 %v1707, %v1785
      %vm1858 = vcmask 1042432
      %v1859 = vrot.slane %v464, 5
      %v1860 = vrot.slane %v467, 5
      %v1861 = vsel %vm1858, %v1859, %v1860
      %v1862 = vrot.slane %v472, 5
      %v1863 = vsel %vm1858, %v1860, %v1862
      %v1864 = vrot.slane %v475, 5
      %v1865 = vsel %vm1858, %v1862, %v1864
      %v1866 = vrot.slane %v480, 5
      %v1867 = vsel %vm1858, %v1864, %v1866
      %v1868 = vrot.slane %v483, 5
      %v1869 = vsel %vm1858, %v1866, %v1868
      %v1870 = vrot.slane %v488, 5
      %v1871 = vsel %vm1858, %v1868, %v1870
      %v1872 = vrot.slane %v491, 5
      %v1873 = vsel %vm1858, %v1870, %v1872
      %v1874 = vrot.slane %v496, 5
      %v1875 = vsel %vm1858, %v1872, %v1874
      %v1876 = vrot.slane %v499, 5
      %v1877 = vsel %vm1858, %v1874, %v1876
      %v1878 = vrot.slane %v504, 5
      %v1879 = vsel %vm1858, %v1876, %v1878
      %v1880 = vrot.slane %v507, 5
      %v1881 = vsel %vm1858, %v1878, %v1880
      %v1882 = vrot.slane %v512, 5
      %v1883 = vsel %vm1858, %v1880, %v1882
      %v1884 = vrot.slane %v515, 5
      %v1885 = vsel %vm1858, %v1882, %v1884
      %v1886 = vrot.slane %v520, 5
      %v1887 = vsel %vm1858, %v1884, %v1886
      %v1888 = vrot.slane %v523, 5
      %v1889 = vsel %vm1858, %v1886, %v1888
      %v1890 = vrot.slane %v528, 5
      %v1891 = vsel %vm1858, %v1888, %v1890
      %v1892 = vrot.slane %v531, 5
      %v1893 = vsel %vm1858, %v1890, %v1892
      %v1894 = vrot.slane %v536, 5
      %v1895 = vsel %vm1858, %v1892, %v1894
      %v1896 = vrot.slane %v539, 5
      %v1897 = vsel %vm1858, %v1894, %v1896
      %v1898 = vrot.slane %v544, 5
      %v1899 = vsel %vm1858, %v1896, %v1898
      %v1900 = vrot.slane %v547, 5
      %v1901 = vsel %vm1858, %v1898, %v1900
      %v1902 = vrot.slane %v552, 5
      %v1903 = vsel %vm1858, %v1900, %v1902
      %v1904 = vrot.slane %v555, 5
      %v1905 = vsel %vm1858, %v1902, %v1904
      %v1906 = vrot.slane %v560, 5
      %v1907 = vsel %vm1858, %v1904, %v1906
      %v1908 = vrot.slane %v563, 5
      %v1909 = vsel %vm1858, %v1906, %v1908
      %v1910 = vrot.slane %v568, 5
      %v1911 = vsel %vm1858, %v1908, %v1910
      %v1912 = vrot.slane %v571, 5
      %v1913 = vsel %vm1858, %v1910, %v1912
      %v1914 = vrot.slane %v576, 5
      %v1915 = vsel %vm1858, %v1912, %v1914
      %v1916 = vrot.slane %v579, 5
      %v1917 = vsel %vm1858, %v1914, %v1916
      %v1918 = vrot.slane %v584, 5
      %v1919 = vsel %vm1858, %v1916, %v1918
      %v1920 = vrot.slane %v587, 5
      %v1921 = vsel %vm1858, %v1918, %v1920
      %v1922 = vrot.slane %v592, 5
      %v1923 = vsel %vm1858, %v1920, %v1922
      %v1924 = vrot.slane %v595, 5
      %v1925 = vsel %vm1858, %v1922, %v1924
      %v1926 = vrot.slane %v600, 5
      %v1927 = vsel %vm1858, %v1924, %v1926
      %v1928 = vrot.slane %v603, 5
      %v1929 = vsel %vm1858, %v1926, %v1928
      %v1930 = vrot.slane %v608, 5
      %v1931 = vsel %vm1858, %v1928, %v1930
      %1932 = vrot.lane.b32.xlu0 %v1861, 100
      %v1933 = vpop.permute.xlu0 %1932
      %1934 = vrot.lane.b32.xlu0 %v1863, 100
      %v1935 = vpop.permute.xlu0 %1934
      %1936 = vrot.lane.b32.xlu0 %v1865, 100
      %v1937 = vpop.permute.xlu0 %1936
      %1938 = vrot.lane.b32.xlu0 %v1867, 100
      %v1939 = vpop.permute.xlu0 %1938
      %1940 = vrot.lane.b32.xlu0 %v1869, 100
      %v1941 = vpop.permute.xlu0 %1940
      %1942 = vrot.lane.b32.xlu0 %v1871, 100
      %v1943 = vpop.permute.xlu0 %1942
      %1944 = vrot.lane.b32.xlu0 %v1873, 100
      %v1945 = vpop.permute.xlu0 %1944
      %1946 = vrot.lane.b32.xlu0 %v1875, 100
      %v1947 = vpop.permute.xlu0 %1946
      %1948 = vrot.lane.b32.xlu0 %v1877, 100
      %v1949 = vpop.permute.xlu0 %1948
      %1950 = vrot.lane.b32.xlu0 %v1879, 100
      %v1951 = vpop.permute.xlu0 %1950
      %1952 = vrot.lane.b32.xlu0 %v1881, 100
      %v1953 = vpop.permute.xlu0 %1952
      %1954 = vrot.lane.b32.xlu0 %v1883, 100
      %v1955 = vpop.permute.xlu0 %1954
      %1956 = vrot.lane.b32.xlu0 %v1885, 100
      %v1957 = vpop.permute.xlu0 %1956
      %1958 = vrot.lane.b32.xlu0 %v1887, 100
      %v1959 = vpop.permute.xlu0 %1958
      %1960 = vrot.lane.b32.xlu0 %v1889, 100
      %v1961 = vpop.permute.xlu0 %1960
      %1962 = vrot.lane.b32.xlu0 %v1891, 100
      %v1963 = vpop.permute.xlu0 %1962
      %1964 = vrot.lane.b32.xlu0 %v1893, 100
      %v1965 = vpop.permute.xlu0 %1964
      %1966 = vrot.lane.b32.xlu0 %v1895, 100
      %v1967 = vpop.permute.xlu0 %1966
      %1968 = vrot.lane.b32.xlu0 %v1897, 100
      %v1969 = vpop.permute.xlu0 %1968
      %1970 = vrot.lane.b32.xlu0 %v1899, 100
      %v1971 = vpop.permute.xlu0 %1970
      %1972 = vrot.lane.b32.xlu0 %v1901, 100
      %v1973 = vpop.permute.xlu0 %1972
      %1974 = vrot.lane.b32.xlu0 %v1903, 100
      %v1975 = vpop.permute.xlu0 %1974
      %1976 = vrot.lane.b32.xlu0 %v1905, 100
      %v1977 = vpop.permute.xlu0 %1976
      %1978 = vrot.lane.b32.xlu0 %v1907, 100
      %v1979 = vpop.permute.xlu0 %1978
      %1980 = vrot.lane.b32.xlu0 %v1909, 100
      %v1981 = vpop.permute.xlu0 %1980
      %1982 = vrot.lane.b32.xlu0 %v1911, 100
      %v1983 = vpop.permute.xlu0 %1982
      %1984 = vrot.lane.b32.xlu0 %v1913, 100
      %v1985 = vpop.permute.xlu0 %1984
      %1986 = vrot.lane.b32.xlu0 %v1915, 100
      %v1987 = vpop.permute.xlu0 %1986
      %1988 = vrot.lane.b32.xlu0 %v1917, 100
      %v1989 = vpop.permute.xlu0 %1988
      %1990 = vrot.lane.b32.xlu0 %v1919, 100
      %v1991 = vpop.permute.xlu0 %1990
      %1992 = vrot.lane.b32.xlu0 %v1921, 100
      %v1993 = vpop.permute.xlu0 %1992
      %1994 = vrot.lane.b32.xlu0 %v1923, 100
      %v1995 = vpop.permute.xlu0 %1994
      %1996 = vrot.lane.b32.xlu0 %v1925, 100
      %v1997 = vpop.permute.xlu0 %1996
      %1998 = vrot.lane.b32.xlu0 %v1927, 100
      %v1999 = vpop.permute.xlu0 %1998
      %2000 = vrot.lane.b32.xlu0 %v1929, 100
      %v2001 = vpop.permute.xlu0 %2000
      %2002 = vrot.lane.b32.xlu0 %v1931, 100
      %v2003 = vpop.permute.xlu0 %2002
      %v2040 = vadd.f32 %v1822, %v1933
      %v2041 = vadd.f32 %v1823, %v1935
      %v2042 = vadd.f32 %v1824, %v1937
      %v2043 = vadd.f32 %v1825, %v1939
      %v2044 = vadd.f32 %v1826, %v1941
      %v2045 = vadd.f32 %v1827, %v1943
      %v2046 = vadd.f32 %v1828, %v1945
      %v2047 = vadd.f32 %v1829, %v1947
      %v2048 = vadd.f32 %v1830, %v1949
      %v2049 = vadd.f32 %v1831, %v1951
      %v2050 = vadd.f32 %v1832, %v1953
      %v2051 = vadd.f32 %v1833, %v1955
      %v2052 = vadd.f32 %v1834, %v1957
      %v2053 = vadd.f32 %v1835, %v1959
      %v2054 = vadd.f32 %v1836, %v1961
      %v2055 = vadd.f32 %v1837, %v1963
      %v2056 = vadd.f32 %v1838, %v1965
      %v2057 = vadd.f32 %v1839, %v1967
      %v2058 = vadd.f32 %v1840, %v1969
      %v2059 = vadd.f32 %v1841, %v1971
      %v2060 = vadd.f32 %v1842, %v1973
      %v2061 = vadd.f32 %v1843, %v1975
      %v2062 = vadd.f32 %v1844, %v1977
      %v2063 = vadd.f32 %v1845, %v1979
      %v2064 = vadd.f32 %v1846, %v1981
      %v2065 = vadd.f32 %v1847, %v1983
      %v2066 = vadd.f32 %v1848, %v1985
      %v2067 = vadd.f32 %v1849, %v1987
      %v2068 = vadd.f32 %v1850, %v1989
      %v2069 = vadd.f32 %v1851, %v1991
      %v2070 = vadd.f32 %v1852, %v1993
      %v2071 = vadd.f32 %v1853, %v1995
      %v2072 = vadd.f32 %v1854, %v1997
      %v2073 = vadd.f32 %v1855, %v1999
      %v2074 = vadd.f32 %v1856, %v2001
      %v2075 = vadd.f32 %v1857, %v2003
      %v2076 = vrot.slane %v464, 6
      %v2077 = vrot.slane %v467, 6
      %v2078 = vsel %vm409, %v2076, %v2077
      %v2079 = vrot.slane %v472, 6
      %v2080 = vsel %vm409, %v2077, %v2079
      %v2081 = vrot.slane %v475, 6
      %v2082 = vsel %vm409, %v2079, %v2081
      %v2083 = vrot.slane %v480, 6
      %v2084 = vsel %vm409, %v2081, %v2083
      %v2085 = vrot.slane %v483, 6
      %v2086 = vsel %vm409, %v2083, %v2085
      %v2087 = vrot.slane %v488, 6
      %v2088 = vsel %vm409, %v2085, %v2087
      %v2089 = vrot.slane %v491, 6
      %v2090 = vsel %vm409, %v2087, %v2089
      %v2091 = vrot.slane %v496, 6
      %v2092 = vsel %vm409, %v2089, %v2091
      %v2093 = vrot.slane %v499, 6
      %v2094 = vsel %vm409, %v2091, %v2093
      %v2095 = vrot.slane %v504, 6
      %v2096 = vsel %vm409, %v2093, %v2095
      %v2097 = vrot.slane %v507, 6
      %v2098 = vsel %vm409, %v2095, %v2097
      %v2099 = vrot.slane %v512, 6
      %v2100 = vsel %vm409, %v2097, %v2099
      %v2101 = vrot.slane %v515, 6
      %v2102 = vsel %vm409, %v2099, %v2101
      %v2103 = vrot.slane %v520, 6
      %v2104 = vsel %vm409, %v2101, %v2103
      %v2105 = vrot.slane %v523, 6
      %v2106 = vsel %vm409, %v2103, %v2105
      %v2107 = vrot.slane %v528, 6
      %v2108 = vsel %vm409, %v2105, %v2107
      %v2109 = vrot.slane %v531, 6
      %v2110 = vsel %vm409, %v2107, %v2109
      %v2111 = vrot.slane %v536, 6
      %v2112 = vsel %vm409, %v2109, %v2111
      %v2113 = vrot.slane %v539, 6
      %v2114 = vsel %vm409, %v2111, %v2113
      %v2115 = vrot.slane %v544, 6
      %v2116 = vsel %vm409, %v2113, %v2115
      %v2117 = vrot.slane %v547, 6
      %v2118 = vsel %vm409, %v2115, %v2117
      %v2119 = vrot.slane %v552, 6
      %v2120 = vsel %vm409, %v2117, %v2119
      %v2121 = vrot.slane %v555, 6
      %v2122 = vsel %vm409, %v2119, %v2121
      %v2123 = vrot.slane %v560, 6
      %v2124 = vsel %vm409, %v2121, %v2123
      %v2125 = vrot.slane %v563, 6
      %v2126 = vsel %vm409, %v2123, %v2125
      %v2127 = vrot.slane %v568, 6
      %v2128 = vsel %vm409, %v2125, %v2127
      %v2129 = vrot.slane %v571, 6
      %v2130 = vsel %vm409, %v2127, %v2129
      %v2131 = vrot.slane %v576, 6
      %v2132 = vsel %vm409, %v2129, %v2131
      %v2133 = vrot.slane %v579, 6
      %v2134 = vsel %vm409, %v2131, %v2133
      %v2135 = vrot.slane %v584, 6
      %v2136 = vsel %vm409, %v2133, %v2135
      %v2137 = vrot.slane %v587, 6
      %v2138 = vsel %vm409, %v2135, %v2137
      %v2139 = vrot.slane %v592, 6
      %v2140 = vsel %vm409, %v2137, %v2139
      %v2141 = vrot.slane %v595, 6
      %v2142 = vsel %vm409, %v2139, %v2141
      %v2143 = vrot.slane %v600, 6
      %v2144 = vsel %vm409, %v2141, %v2143
      %v2145 = vrot.slane %v603, 6
      %v2146 = vsel %vm409, %v2143, %v2145
      %v2147 = vrot.slane %v608, 6
      %v2148 = vsel %vm409, %v2145, %v2147
      %2149 = vrot.lane.b32.xlu0 %v2078, 96
      %v2150 = vpop.permute.xlu0 %2149
      %2151 = vrot.lane.b32.xlu0 %v2080, 96
      %v2152 = vpop.permute.xlu0 %2151
      %2153 = vrot.lane.b32.xlu0 %v2082, 96
      %v2154 = vpop.permute.xlu0 %2153
      %2155 = vrot.lane.b32.xlu0 %v2084, 96
      %v2156 = vpop.permute.xlu0 %2155
      %2157 = vrot.lane.b32.xlu0 %v2086, 96
      %v2158 = vpop.permute.xlu0 %2157
      %2159 = vrot.lane.b32.xlu0 %v2088, 96
      %v2160 = vpop.permute.xlu0 %2159
      %2161 = vrot.lane.b32.xlu0 %v2090, 96
      %v2162 = vpop.permute.xlu0 %2161
      %2163 = vrot.lane.b32.xlu0 %v2092, 96
      %v2164 = vpop.permute.xlu0 %2163
      %2165 = vrot.lane.b32.xlu0 %v2094, 96
      %v2166 = vpop.permute.xlu0 %2165
      %2167 = vrot.lane.b32.xlu0 %v2096, 96
      %v2168 = vpop.permute.xlu0 %2167
      %2169 = vrot.lane.b32.xlu0 %v2098, 96
      %v2170 = vpop.permute.xlu0 %2169
      %2171 = vrot.lane.b32.xlu0 %v2100, 96
      %v2172 = vpop.permute.xlu0 %2171
      %2173 = vrot.lane.b32.xlu0 %v2102, 96
      %v2174 = vpop.permute.xlu0 %2173
      %2175 = vrot.lane.b32.xlu0 %v2104, 96
      %v2176 = vpop.permute.xlu0 %2175
      %2177 = vrot.lane.b32.xlu0 %v2106, 96
      %v2178 = vpop.permute.xlu0 %2177
      %2179 = vrot.lane.b32.xlu0 %v2108, 96
      %v2180 = vpop.permute.xlu0 %2179
      %2181 = vrot.lane.b32.xlu0 %v2110, 96
      %v2182 = vpop.permute.xlu0 %2181
      %2183 = vrot.lane.b32.xlu0 %v2112, 96
      %v2184 = vpop.permute.xlu0 %2183
      %2185 = vrot.lane.b32.xlu0 %v2114, 96
      %v2186 = vpop.permute.xlu0 %2185
      %2187 = vrot.lane.b32.xlu0 %v2116, 96
      %v2188 = vpop.permute.xlu0 %2187
      %2189 = vrot.lane.b32.xlu0 %v2118, 96
      %v2190 = vpop.permute.xlu0 %2189
      %2191 = vrot.lane.b32.xlu0 %v2120, 96
      %v2192 = vpop.permute.xlu0 %2191
      %2193 = vrot.lane.b32.xlu0 %v2122, 96
      %v2194 = vpop.permute.xlu0 %2193
      %2195 = vrot.lane.b32.xlu0 %v2124, 96
      %v2196 = vpop.permute.xlu0 %2195
      %2197 = vrot.lane.b32.xlu0 %v2126, 96
      %v2198 = vpop.permute.xlu0 %2197
      %2199 = vrot.lane.b32.xlu0 %v2128, 96
      %v2200 = vpop.permute.xlu0 %2199
      %2201 = vrot.lane.b32.xlu0 %v2130, 96
      %v2202 = vpop.permute.xlu0 %2201
      %2203 = vrot.lane.b32.xlu0 %v2132, 96
      %v2204 = vpop.permute.xlu0 %2203
      %2205 = vrot.lane.b32.xlu0 %v2134, 96
      %v2206 = vpop.permute.xlu0 %2205
      %2207 = vrot.lane.b32.xlu0 %v2136, 96
      %v2208 = vpop.permute.xlu0 %2207
      %2209 = vrot.lane.b32.xlu0 %v2138, 96
      %v2210 = vpop.permute.xlu0 %2209
      %2211 = vrot.lane.b32.xlu0 %v2140, 96
      %v2212 = vpop.permute.xlu0 %2211
      %2213 = vrot.lane.b32.xlu0 %v2142, 96
      %v2214 = vpop.permute.xlu0 %2213
      %2215 = vrot.lane.b32.xlu0 %v2144, 96
      %v2216 = vpop.permute.xlu0 %2215
      %2217 = vrot.lane.b32.xlu0 %v2146, 96
      %v2218 = vpop.permute.xlu0 %2217
      %2219 = vrot.lane.b32.xlu0 %v2148, 96
      %v2220 = vpop.permute.xlu0 %2219
      %v2257 = vadd.f32 %v2040, %v2150
      %v2258 = vadd.f32 %v2041, %v2152
      %v2259 = vadd.f32 %v2042, %v2154
      %v2260 = vadd.f32 %v2043, %v2156
      %v2261 = vadd.f32 %v2044, %v2158
      %v2262 = vadd.f32 %v2045, %v2160
      %v2263 = vadd.f32 %v2046, %v2162
      %v2264 = vadd.f32 %v2047, %v2164
      %v2265 = vadd.f32 %v2048, %v2166
      %v2266 = vadd.f32 %v2049, %v2168
      %v2267 = vadd.f32 %v2050, %v2170
      %v2268 = vadd.f32 %v2051, %v2172
      %v2269 = vadd.f32 %v2052, %v2174
      %v2270 = vadd.f32 %v2053, %v2176
      %v2271 = vadd.f32 %v2054, %v2178
      %v2272 = vadd.f32 %v2055, %v2180
      %v2273 = vadd.f32 %v2056, %v2182
      %v2274 = vadd.f32 %v2057, %v2184
      %v2275 = vadd.f32 %v2058, %v2186
      %v2276 = vadd.f32 %v2059, %v2188
      %v2277 = vadd.f32 %v2060, %v2190
      %v2278 = vadd.f32 %v2061, %v2192
      %v2279 = vadd.f32 %v2062, %v2194
      %v2280 = vadd.f32 %v2063, %v2196
      %v2281 = vadd.f32 %v2064, %v2198
      %v2282 = vadd.f32 %v2065, %v2200
      %v2283 = vadd.f32 %v2066, %v2202
      %v2284 = vadd.f32 %v2067, %v2204
      %v2285 = vadd.f32 %v2068, %v2206
      %v2286 = vadd.f32 %v2069, %v2208
      %v2287 = vadd.f32 %v2070, %v2210
      %v2288 = vadd.f32 %v2071, %v2212
      %v2289 = vadd.f32 %v2072, %v2214
      %v2290 = vadd.f32 %v2073, %v2216
      %v2291 = vadd.f32 %v2074, %v2218
      %v2292 = vadd.f32 %v2075, %v2220
      %v2293 = vpack.c.bf16 %v2258, %v2257
      %v2294 = vpack.c.bf16 %v2260, %v2259
      %v2295 = vpack.c.bf16 %v2262, %v2261
      %v2296 = vpack.c.bf16 %v2264, %v2263
      %v2297 = vpack.c.bf16 %v2266, %v2265
      %v2298 = vpack.c.bf16 %v2268, %v2267
      %v2299 = vpack.c.bf16 %v2270, %v2269
      %v2300 = vpack.c.bf16 %v2272, %v2271
      %v2301 = vpack.c.bf16 %v2274, %v2273
      %v2302 = vpack.c.bf16 %v2276, %v2275
      %v2303 = vpack.c.bf16 %v2278, %v2277
      %v2304 = vpack.c.bf16 %v2280, %v2279
      %v2305 = vpack.c.bf16 %v2282, %v2281
      %v2306 = vpack.c.bf16 %v2284, %v2283
      %v2307 = vpack.c.bf16 %v2286, %v2285
      %v2308 = vpack.c.bf16 %v2288, %v2287
      %v2309 = vpack.c.bf16 %v2290, %v2289
      %v2310 = vpack.c.bf16 %v2292, %v2291
      %v2311 = vld [vmem:[%s2] sm:$0x3]
      %v2313 = vsel %vm345, %v2293, 0
      %v2316 = vsel %vm345, %v2294, 0
      %v2319 = vsel %vm345, %v2295, 0
      %v2322 = vsel %vm345, %v2296, 0
      %v2325 = vsel %vm345, %v2297, 0
      %v2328 = vsel %vm345, %v2298, 0
      %v2331 = vsel %vm345, %v2299, 0
      %v2334 = vsel %vm345, %v2300, 0
      %v2337 = vsel %vm345, %v2301, 0
      %v2340 = vsel %vm345, %v2302, 0
      %v2343 = vsel %vm345, %v2303, 0
      %v2346 = vsel %vm345, %v2304, 0
      %v2349 = vsel %vm345, %v2305, 0
      %v2352 = vsel %vm345, %v2306, 0
      %v2355 = vsel %vm345, %v2307, 0
      %v2358 = vsel %vm345, %v2308, 0
      %v2361 = vsel %vm345, %v2309, 0
      %v2364 = vsel %vm345, %v2310, 0
      %v2367 = vsel %vm409, %v2311, 0
      %2369 = vmatprep.subr.bf16.mxu0 0
      %2370 = vmatpush1.bf16.msra.mxu0 0
      %2371 = vmatprep.subr.bf16.mxu0 0
      %2372 = vmatpush1.bf16.msra.mxu0 0
      %2373 = vmatprep.subr.bf16.mxu0 0
      %2374 = vmatpush1.bf16.msra.mxu0 0
      %2375 = vmatprep.subr.bf16.mxu0 0
      %2376 = vmatpush1.bf16.msra.mxu0 0
      %2377 = vmatprep.subr.bf16.mxu0 0
      %2378 = vmatpush1.bf16.msra.mxu0 0
      %2379 = vmatprep.subr.bf16.mxu0 0
      %2380 = vmatpush1.bf16.msra.mxu0 0
      %2381 = vmatprep.subr.bf16.mxu0 0
      %2382 = vmatpush1.bf16.msra.mxu0 0
      %2383 = vmatprep.subr.bf16.mxu0 0
      %2384 = vmatpush1.bf16.msra.mxu0 %v2367
      %2385 = vmatprep.subr.bf16.mxu0 0
      %2386 = vmatpush2.bf16.msra.mxu0 0
      %2387 = vmatprep.subr.bf16.mxu0 0
      %2388 = vmatpush2.bf16.msra.mxu0 0
      %2389 = vmatprep.subr.bf16.mxu0 0
      %2390 = vmatpush2.bf16.msra.mxu0 0
      %2391 = vmatprep.subr.bf16.mxu0 0
      %2392 = vmatpush2.bf16.msra.mxu0 0
      %2393 = vmatprep.subr.bf16.mxu0 0
      %2394 = vmatpush2.bf16.msra.mxu0 0
      %2395 = vmatprep.subr.bf16.mxu0 0
      %2396 = vmatpush2.bf16.msra.mxu0 0
      %2397 = vmatprep.subr.bf16.mxu0 0
      %2398 = vmatpush2.bf16.msra.mxu0 0
      %2399 = vmatprep.subr.bf16.mxu0 0
      %2400 = vmatpush2.bf16.msra.mxu0 0
      %2401 = vmatprep.mubr.bf16.mxu0 0
      %2402 = vmatmul.mubr.bf16.gmra.mxu0 %v2313
      %v2403 = vpop.f32.mrf.mxu0
      %v2404 = vadd.f32 0.0, %v2403
      %v2405 = vpop.f32.mrf.mxu0
      %v2406 = vpop.f32.mrf.mxu0
      %v2407 = vadd.f32 0.0, %v2406
      %v2408 = vpop.f32.mrf.mxu0
      %2409 = vmatprep.mubr.bf16.mxu0 0
      %2410 = vmatmul.mubr.bf16.gmra.mxu0 %v2316
      %v2411 = vpop.f32.mrf.mxu0
      %v2412 = vadd.f32 0.0, %v2411
      %v2413 = vpop.f32.mrf.mxu0
      %v2414 = vpop.f32.mrf.mxu0
      %v2415 = vadd.f32 0.0, %v2414
      %v2416 = vpop.f32.mrf.mxu0
      %2417 = vmatprep.mubr.bf16.mxu0 0
      %2418 = vmatmul.mubr.bf16.gmra.mxu0 %v2319
      %v2419 = vpop.f32.mrf.mxu0
      %v2420 = vadd.f32 0.0, %v2419
      %v2421 = vpop.f32.mrf.mxu0
      %v2422 = vpop.f32.mrf.mxu0
      %v2423 = vadd.f32 0.0, %v2422
      %v2424 = vpop.f32.mrf.mxu0
      %2425 = vmatprep.mubr.bf16.mxu0 0
      %2426 = vmatmul.mubr.bf16.gmra.mxu0 %v2322
      %v2427 = vpop.f32.mrf.mxu0
      %v2428 = vadd.f32 0.0, %v2427
      %v2429 = vpop.f32.mrf.mxu0
      %v2430 = vpop.f32.mrf.mxu0
      %v2431 = vadd.f32 0.0, %v2430
      %v2432 = vpop.f32.mrf.mxu0
      %2433 = vmatprep.mubr.bf16.mxu0 0
      %2434 = vmatmul.mubr.bf16.gmra.mxu0 %v2325
      %v2435 = vpop.f32.mrf.mxu0
      %v2436 = vadd.f32 0.0, %v2435
      %v2437 = vpop.f32.mrf.mxu0
      %v2438 = vpop.f32.mrf.mxu0
      %v2439 = vadd.f32 0.0, %v2438
      %v2440 = vpop.f32.mrf.mxu0
      %2441 = vmatprep.mubr.bf16.mxu0 0
      %2442 = vmatmul.mubr.bf16.gmra.mxu0 %v2328
      %v2443 = vpop.f32.mrf.mxu0
      %v2444 = vadd.f32 0.0, %v2443
      %v2445 = vpop.f32.mrf.mxu0
      %v2446 = vpop.f32.mrf.mxu0
      %v2447 = vadd.f32 0.0, %v2446
      %v2448 = vpop.f32.mrf.mxu0
      %2449 = vmatprep.mubr.bf16.mxu0 0
      %2450 = vmatmul.mubr.bf16.gmra.mxu0 %v2331
      %v2451 = vpop.f32.mrf.mxu0
      %v2452 = vadd.f32 0.0, %v2451
      %v2453 = vpop.f32.mrf.mxu0
      %v2454 = vpop.f32.mrf.mxu0
      %v2455 = vadd.f32 0.0, %v2454
      %v2456 = vpop.f32.mrf.mxu0
      %2457 = vmatprep.mubr.bf16.mxu0 0
      %2458 = vmatmul.mubr.bf16.gmra.mxu0 %v2334
      %v2459 = vpop.f32.mrf.mxu0
      %v2460 = vadd.f32 0.0, %v2459
      %v2461 = vpop.f32.mrf.mxu0
      %v2462 = vpop.f32.mrf.mxu0
      %v2463 = vadd.f32 0.0, %v2462
      %v2464 = vpop.f32.mrf.mxu0
      %2465 = vmatprep.mubr.bf16.mxu0 0
      %2466 = vmatmul.mubr.bf16.gmra.mxu0 %v2337
      %v2467 = vpop.f32.mrf.mxu0
      %v2468 = vadd.f32 0.0, %v2467
      %v2469 = vpop.f32.mrf.mxu0
      %v2470 = vpop.f32.mrf.mxu0
      %v2471 = vadd.f32 0.0, %v2470
      %v2472 = vpop.f32.mrf.mxu0
      %2473 = vmatprep.mubr.bf16.mxu0 0
      %2474 = vmatmul.mubr.bf16.gmra.mxu0 %v2340
      %v2475 = vpop.f32.mrf.mxu0
      %v2476 = vadd.f32 0.0, %v2475
      %v2477 = vpop.f32.mrf.mxu0
      %v2478 = vpop.f32.mrf.mxu0
      %v2479 = vadd.f32 0.0, %v2478
      %v2480 = vpop.f32.mrf.mxu0
      %2481 = vmatprep.mubr.bf16.mxu0 0
      %2482 = vmatmul.mubr.bf16.gmra.mxu0 %v2343
      %v2483 = vpop.f32.mrf.mxu0
      %v2484 = vadd.f32 0.0, %v2483
      %v2485 = vpop.f32.mrf.mxu0
      %v2486 = vpop.f32.mrf.mxu0
      %v2487 = vadd.f32 0.0, %v2486
      %v2488 = vpop.f32.mrf.mxu0
      %2489 = vmatprep.mubr.bf16.mxu0 0
      %2490 = vmatmul.mubr.bf16.gmra.mxu0 %v2346
      %v2491 = vpop.f32.mrf.mxu0
      %v2492 = vadd.f32 0.0, %v2491
      %v2493 = vpop.f32.mrf.mxu0
      %v2494 = vpop.f32.mrf.mxu0
      %v2495 = vadd.f32 0.0, %v2494
      %v2496 = vpop.f32.mrf.mxu0
      %2497 = vmatprep.mubr.bf16.mxu0 0
      %2498 = vmatmul.mubr.bf16.gmra.mxu0 %v2349
      %v2499 = vpop.f32.mrf.mxu0
      %v2500 = vadd.f32 0.0, %v2499
      %v2501 = vpop.f32.mrf.mxu0
      %v2502 = vpop.f32.mrf.mxu0
      %v2503 = vadd.f32 0.0, %v2502
      %v2504 = vpop.f32.mrf.mxu0
      %2505 = vmatprep.mubr.bf16.mxu0 0
      %2506 = vmatmul.mubr.bf16.gmra.mxu0 %v2352
      %v2507 = vpop.f32.mrf.mxu0
      %v2508 = vadd.f32 0.0, %v2507
      %v2509 = vpop.f32.mrf.mxu0
      %v2510 = vpop.f32.mrf.mxu0
      %v2511 = vadd.f32 0.0, %v2510
      %v2512 = vpop.f32.mrf.mxu0
      %2513 = vmatprep.mubr.bf16.mxu0 0
      %2514 = vmatmul.mubr.bf16.gmra.mxu0 %v2355
      %v2515 = vpop.f32.mrf.mxu0
      %v2516 = vadd.f32 0.0, %v2515
      %v2517 = vpop.f32.mrf.mxu0
      %v2518 = vpop.f32.mrf.mxu0
      %v2519 = vadd.f32 0.0, %v2518
      %v2520 = vpop.f32.mrf.mxu0
      %2521 = vmatprep.mubr.bf16.mxu0 0
      %2522 = vmatmul.mubr.bf16.gmra.mxu0 %v2358
      %v2523 = vpop.f32.mrf.mxu0
      %v2524 = vadd.f32 0.0, %v2523
      %v2525 = vpop.f32.mrf.mxu0
      %v2526 = vpop.f32.mrf.mxu0
      %v2527 = vadd.f32 0.0, %v2526
      %v2528 = vpop.f32.mrf.mxu0
      %2529 = vmatprep.mubr.bf16.mxu0 0
      %2530 = vmatmul.mubr.bf16.gmra.mxu0 %v2361
      %v2531 = vpop.f32.mrf.mxu0
      %v2532 = vadd.f32 0.0, %v2531
      %v2533 = vpop.f32.mrf.mxu0
      %v2534 = vpop.f32.mrf.mxu0
      %v2535 = vadd.f32 0.0, %v2534
      %v2536 = vpop.f32.mrf.mxu0
      %2537 = vmatprep.mubr.bf16.mxu0 0
      %2538 = vmatmul.mubr.bf16.gmra.mxu0 %v2364
      %v2539 = vpop.f32.mrf.mxu0
      %v2540 = vadd.f32 0.0, %v2539
      %v2541 = vpop.f32.mrf.mxu0
      %v2542 = vpop.f32.mrf.mxu0
      %v2543 = vadd.f32 0.0, %v2542
      %v2544 = vpop.f32.mrf.mxu0
      %2545 = vdwg.mxu0
      %vm2546 = vcmask 64512
      %2547 = vst.msk [vmem:[%s192] sm:$0xff] %vm2546, %v2404
      %2548 = vst.msk [vmem:[%s192 + $0x8] sm:$0xff] %vm2546, %v2407
      %2549 = vst.msk [vmem:[%s192 + $0x10] sm:$0xff] %vm2546, %v2412
      %2550 = vst.msk [vmem:[%s192 + $0x18] sm:$0xff] %vm2546, %v2415
      %2551 = vst.msk [vmem:[%s192 + $0x20] sm:$0xff] %vm2546, %v2420
      %2552 = vst.msk [vmem:[%s192 + $0x28] sm:$0xff] %vm2546, %v2423
      %2553 = vst.msk [vmem:[%s192 + $0x30] sm:$0xff] %vm2546, %v2428
      %2554 = vst.msk [vmem:[%s192 + $0x38] sm:$0xff] %vm2546, %v2431
      %2555 = vst.msk [vmem:[%s192 + $0x40] sm:$0xff] %vm2546, %v2436
      %2556 = vst.msk [vmem:[%s192 + $0x48] sm:$0xff] %vm2546, %v2439
      %2557 = vst.msk [vmem:[%s192 + $0x50] sm:$0xff] %vm2546, %v2444
      %2558 = vst.msk [vmem:[%s192 + $0x58] sm:$0xff] %vm2546, %v2447
      %2559 = vst.msk [vmem:[%s192 + $0x60] sm:$0xff] %vm2546, %v2452
      %2560 = vst.msk [vmem:[%s192 + $0x68] sm:$0xff] %vm2546, %v2455
      %2561 = vst.msk [vmem:[%s192 + $0x70] sm:$0xff] %vm2546, %v2460
      %2562 = vst.msk [vmem:[%s192 + $0x78] sm:$0xff] %vm2546, %v2463
      %2563 = vst.msk [vmem:[%s192 + $0x80] sm:$0xff] %vm2546, %v2468
      %2564 = vst.msk [vmem:[%s192 + $0x88] sm:$0xff] %vm2546, %v2471
      %2565 = vst.msk [vmem:[%s192 + $0x90] sm:$0xff] %vm2546, %v2476
      %2566 = vst.msk [vmem:[%s192 + $0x98] sm:$0xff] %vm2546, %v2479
      %2567 = vst.msk [vmem:[%s192 + $0xa0] sm:$0xff] %vm2546, %v2484
      %2568 = vst.msk [vmem:[%s192 + $0xa8] sm:$0xff] %vm2546, %v2487
      %2569 = vst.msk [vmem:[%s192 + $0xb0] sm:$0xff] %vm2546, %v2492
      %2570 = vst.msk [vmem:[%s192 + $0xb8] sm:$0xff] %vm2546, %v2495
      %2571 = vst.msk [vmem:[%s192 + $0xc0] sm:$0xff] %vm2546, %v2500
      %2572 = vst.msk [vmem:[%s192 + $0xc8] sm:$0xff] %vm2546, %v2503
      %2573 = vst.msk [vmem:[%s192 + $0xd0] sm:$0xff] %vm2546, %v2508
      %2574 = vst.msk [vmem:[%s192 + $0xd8] sm:$0xff] %vm2546, %v2511
      %2575 = vst.msk [vmem:[%s192 + $0xe0] sm:$0xff] %vm2546, %v2516
      %2576 = vst.msk [vmem:[%s192 + $0xe8] sm:$0xff] %vm2546, %v2519
      %2577 = vst.msk [vmem:[%s192 + $0xf0] sm:$0xff] %vm2546, %v2524
      %2578 = vst.msk [vmem:[%s192 + $0xf8] sm:$0xff] %vm2546, %v2527
      %2579 = vst.msk [vmem:[%s192 + $0x100] sm:$0xff] %vm2546, %v2532
      %2580 = vst.msk [vmem:[%s192 + $0x108] sm:$0xff] %vm2546, %v2535
      %2581 = vst.msk [vmem:[%s192 + $0x110] sm:$0xff] %vm2546, %v2540
      %2582 = vst.msk [vmem:[%s192 + $0x118] sm:$0xff] %vm2546, %v2543
      %s2583 = smul.u32 36, %s19
      %p2584 = scmp.lt.s32.totalorder %s18, 1
      %s2585 = scalar_select %p2584, %s18, 1
      %p2586 = scmp.lt.s32.totalorder %s2583, 35
      %s2587 = scalar_select %p2586, %s2583, 35
      %s2588 = smul.addr %s2585, 36
      %s2589 = sadd.s32 %s2587, %s2588
      %s2590 = smul.addr %s2589, 8
      %s2591 = scalar_lea.vmem %s3, %s2590
      // Predicated region
      $region33: #{tpu_custom_call.1} parent=31 // pred_check
        %p2592 = pneg %p114
      $region34: #{tpu_custom_call.1} parent=31 // pred_check_branch
        %2594 = sbr.rel (%p2592) target = $region36
      $region35: #{tpu_custom_call.1} parent=31 // pred_region
        %s2595 = smul.u32 36, %s19
      $region36: #{tpu_custom_call.1} parent=31 // pred_fallthru
        _
    $region32: #{tpu_custom_call.1} parent=5 // pred_fallthru
      _
    %p2596 = scmp.le.s32.totalorder 2, %s9
    // Predicated region
    $region37: #{tpu_custom_call.1} parent=5 // pred_check
      %p2597 = pneg %p2596
    $region38: #{tpu_custom_call.1} parent=5 // pred_check_branch
      %2599 = sbr.rel (%p2597) target = $region40
    $region39: #{tpu_custom_call.1} parent=5 // pred_region
      %s2600 = ssub.s32 %s9, 2
      // Predicated region
      $region41: #{tpu_custom_call.1} parent=39 // pred_check
        %p2601 = pneg %p120
      $region42: #{tpu_custom_call.1} parent=39 // pred_check_branch
        %2603 = sbr.rel (%p2601) target = $region44
      $region43: #{tpu_custom_call.1} parent=39 // pred_region
        %s2604 = smul.u32 36, %s21
        %p2605 = scmp.lt.s32.totalorder %s20, 1
        %s2606 = scalar_select %p2605, %s20, 1
        %p2607 = scmp.lt.s32.totalorder %s2604, 35
        %s2608 = scalar_select %p2607, %s2604, 35
        %s2609 = smul.addr %s2606, 36
        %s2610 = sadd.s32 %s2608, %s2609
        %s2611 = smul.addr %s2610, 8
        %s2612 = scalar_lea.vmem %s3, %s2611
      $region44: #{tpu_custom_call.1} parent=39 // pred_fallthru
        _
    $region40: #{tpu_custom_call.1} parent=5 // pred_fallthru
      _
  $region6: #{tpu_custom_call.1} parent=0 // loop_footer
    %s13 = sadd.s32 1, %s9
  $region7: #{tpu_custom_call.1} parent=0 // loop_footer_branch
    %8 = sbr.rel target = $region3
  $region8: #{tpu_custom_call.1} parent=0 // loop_exit
    _

</llo_original>
